<compile_context>
chip_gen: v7x
topology: tpu7x:2x2x1
jax: 0.10.0
libtpu: 0.0.40
codegen_flags: <defaults>
</compile_context>

<pallas_src>
import jax
import jax.numpy as jnp
from jax import lax
from jax.experimental import pallas as pl
from jax.experimental.pallas import tpu as pltpu


# ---------------------------------------------------------------- kernel ----
def _make_kernel(L):
    """Kernel closure over the per-sample length L (needed for boundary masks)."""
    bf16 = jnp.bfloat16

    def kernel(x_ref, w1s_ref, b1_ref, rw3s_ref, rw1t_ref,
               t1s_ref, t1b_ref, t2s_ref, t2b_ref, out_ref):
        N = x_ref.shape[-1]                       # = TB * L (lane extent)
        NL = rw3s_ref.shape[0]

        # ---- per-sample boundary masks: built ONCE, reused by every conv ----
        col = lax.broadcasted_iota(jnp.int32, (1, N), 1) % L
        not_start = col != 0                      # column is not a sample start
        not_end = col != (L - 1)                  # column is not a sample end

        def prev(a):    # column n <- a[:, n-1]; zero at per-sample starts
            return jnp.where(not_start, pltpu.roll(a, 1, axis=1), 0.0)

        def nxt(a):     # column n <- a[:, n+1]; zero at per-sample ends
            return jnp.where(not_end, pltpu.roll(a, N - 1, axis=1), 0.0)

        def mm(w, a):   # bf16 MXU dot, f32 accumulation
            return jnp.dot(w, a.astype(bf16), preferred_element_type=jnp.float32)

        x = x_ref[0]                                              # (Cin, N) f32

        # ---- conv_1: Cin -> H, k=3, p=1, bias (3 accumulated tap-dots) ------
        h = (mm(w1s_ref[1], x) + mm(w1s_ref[0], prev(x)) + mm(w1s_ref[2], nxt(x))
             + b1_ref[...])                                       # (H, N) f32

        # ---- residual stack (NL small -> static loop; switch to
        #      lax.fori_loop(..., unroll=True) if NL grows and vregs spill) ---
        for l in range(NL):
            a = jnp.maximum(h, 0.0)
            t = (mm(rw3s_ref[l, 1], a) + mm(rw3s_ref[l, 0], prev(a))
                 + mm(rw3s_ref[l, 2], nxt(a)))                    # (R, N)
            t = jnp.maximum(t, 0.0)
            h = h + mm(rw1t_ref[l], t)
        h = jnp.maximum(h, 0.0)

        # ---- conv_trans_1: H -> H//2, k=4, s=2, p=1, bias; ReLU -------------
        a_even = jnp.maximum(mm(t1s_ref[1], h) + mm(t1s_ref[3], prev(h))
                             + t1b_ref[...], 0.0)                 # (H2, N)
        a_odd = jnp.maximum(mm(t1s_ref[2], h) + mm(t1s_ref[0], nxt(h))
                            + t1b_ref[...], 0.0)                  # (H2, N)

        # ---- conv_trans_2: H//2 -> 3, k=4, s=2, p=1, bias -------------------
        # All 4 output phases x 3 channels packed on sublanes (row = c*4 + r),
        # zero-padded to 16 rows -> single aligned full-slab store.
        p = (mm(t2s_ref[0], a_even) + mm(t2s_ref[1], a_odd)
             + mm(t2s_ref[2], prev(a_odd)) + mm(t2s_ref[3], nxt(a_even))
             + t2b_ref[...])                                      # (16, N)

        out_ref[0] = p                              # one lane-dense unmasked store

    return kernel


# ---------------------------------------------------- weight pre-stacking ---
def _prepare_params(params):
    """Host-side (tiny) re-layout: per-tap matrices, bf16 for the MXU operands,
    f32 biases; the conv_trans_2 phase matrices are padded to 16 output rows."""
    f32, bf16 = jnp.float32, jnp.bfloat16
    w1, b1 = params['w1'], params['b1']            # (3,Cin,H), (1,H)
    rw3, rw1 = params['rw3'], params['rw1']        # (NL,3,H,R), (NL,R,H)
    t1w, t1b = params['t1w'], params['t1b']        # (4,H,H2),  (1,H2)
    t2w, t2b = params['t2w'], params['t2b']        # (4,H2,3),  (1,3)
    H2 = t1w.shape[2]

    w1s = jnp.transpose(w1, (0, 2, 1)).astype(bf16)               # (3, H, Cin)
    b1c = jnp.transpose(b1, (1, 0)).astype(f32)                   # (H, 1)
    rw3s = jnp.transpose(rw3, (0, 1, 3, 2)).astype(bf16)          # (NL, 3, R, H)
    rw1t = jnp.transpose(rw1, (0, 2, 1)).astype(bf16)             # (NL, H, R)
    t1s = jnp.transpose(t1w, (0, 2, 1)).astype(bf16)              # (4, H2, H)
    t1bc = jnp.transpose(t1b, (1, 0)).astype(f32)                 # (H2, 1)

    VT = jnp.transpose(t2w, (0, 2, 1)).astype(f32)                # (4, 3, H2)
    Z3 = jnp.zeros((3, H2), f32)

    def _phase_rows(rows):                     # rows[r] is (3, H2) for r=0..3
        m = jnp.stack(rows, axis=1).reshape(12, H2)               # row = c*4 + r
        return jnp.concatenate([m, jnp.zeros((4, H2), f32)], 0)   # pad 12 -> 16

    t2s = jnp.stack([
        _phase_rows([VT[1], VT[2], VT[3], Z3]),     # acts on a_even
        _phase_rows([Z3, VT[0], VT[1], VT[2]]),     # acts on a_odd
        _phase_rows([VT[3], Z3, Z3, Z3]),           # acts on prev(a_odd)
        _phase_rows([Z3, Z3, Z3, VT[0]]),           # acts on next(a_even)
    ], axis=0).astype(bf16)                                       # (4, 16, H2)
    t2bc = jnp.concatenate(
        [jnp.repeat(jnp.transpose(t2b, (1, 0)), 4, axis=0),
         jnp.zeros((4, 1), f32)], axis=0).astype(f32)             # (16, 1)

    return dict(w1s=w1s, b1c=b1c, rw3s=rw3s, rw1t=rw1t,
                t1s=t1s, t1bc=t1bc, t2s=t2s, t2bc=t2bc)


def _pick_block_batch(B, L, *, lane_target=512, lane_cap=8192):
    """Pick TB: keep G = B//TB >= 2 when possible (both v7x TensorCores busy),
    then grow TB until TB*L reaches lane_target (amortizes per-grid-step
    overhead / MXU fill) without exceeding lane_cap (~8K f32 lanes of live
    activations stays well inside v7x's 64 MiB VMEM)."""
    max_tb = B if B < 2 else max(1, B // 2)
    best = 1
    for tb in range(1, max_tb + 1):
        if B % tb:
            continue
        if tb * L > max(lane_cap, L):
            break
        best = tb
        if tb * L >= lane_target:
            break
    return best


# ---------------------------------------------------------------- wrapper ---
def imu_decoder_forward(x_ncl, params, *, block_batch=None):
    """x_ncl: (B, Cin, L)  ->  (B, 3, 4*L)   (same as the PyTorch module)."""
    B, Cin, L = x_ncl.shape
    pp = _prepare_params(params)
    H = pp['w1s'].shape[1]
    NL, _, R, _ = pp['rw3s'].shape
    H2 = pp['t1s'].shape[1]

    TB = block_batch if block_batch is not None else _pick_block_batch(B, L)
    assert B % TB == 0, (B, TB)
    G = B // TB
    N = TB * L

    # Fold TB samples side-by-side on the lane (time) axis host-side (one tiny
    # XLA transpose), so the kernel reads a single aligned lane-dense tile.
    x_g = x_ncl.reshape(G, TB, Cin, L).transpose(0, 2, 1, 3).reshape(G, Cin, N)

    out = pl.pallas_call(
        _make_kernel(L),
        out_shape=jax.ShapeDtypeStruct((G, 16, N), jnp.float32),
        grid_spec=pltpu.PrefetchScalarGridSpec(
            num_scalar_prefetch=0,
            grid=(G,),
            in_specs=[
                pl.BlockSpec((1, Cin, N), lambda g: (g, 0, 0)),
                pl.BlockSpec((3, H, Cin), lambda g: (0, 0, 0)),
                pl.BlockSpec((H, 1), lambda g: (0, 0)),
                pl.BlockSpec((NL, 3, R, H), lambda g: (0, 0, 0, 0)),
                pl.BlockSpec((NL, H, R), lambda g: (0, 0, 0)),
                pl.BlockSpec((4, H2, H), lambda g: (0, 0, 0)),
                pl.BlockSpec((H2, 1), lambda g: (0, 0)),
                pl.BlockSpec((4, 16, H2), lambda g: (0, 0, 0)),
                pl.BlockSpec((16, 1), lambda g: (0, 0)),
            ],
            out_specs=pl.BlockSpec((1, 16, N), lambda g: (g, 0, 0)),
        ),
        compiler_params=pltpu.CompilerParams(
            dimension_semantics=("parallel",),   # batch grid axis -> both v7x TCs
            # Live activations cost < ~1 KiB per lane (f32); 48 MiB keeps
            # headroom even on v7x's 64 MiB VMEM for the largest allowed TB*L.
            vmem_limit_bytes=48 * 1024 * 1024,
        ),
    )(x_g, pp['w1s'], pp['b1c'], pp['rw3s'], pp['rw1t'],
      pp['t1s'], pp['t1bc'], pp['t2s'], pp['t2bc'])

    # (G, 16, TB*L) packed rows (c*4 + r) -> (B, 3, 4L): host-side un-stitch +
    # stride-4 phase interleave (lane-granularity shuffle on a tiny tensor).
    y = out[:, :12, :].reshape(G, 3, 4, TB, L)
    y = jnp.transpose(y, (0, 3, 1, 4, 2)).reshape(B, 3, 4 * L)
    return y


# ------------------------------------------------------------- reference ----
def reference_forward(x_ncl, params, *, num_residual_layers):
    """Pure-JAX (lax.conv) reference with PyTorch Conv1d/ConvTranspose1d semantics."""
    def conv1d(x, w_oik, b=None, pad=1):
        y = lax.conv_general_dilated(x, w_oik, window_strides=(1,),
                                     padding=[(pad, pad)],
                                     dimension_numbers=('NCH', 'OIH', 'NCH'))
        if b is not None:
            y = y + b[None, :, None]
        return y

    def conv_t1d(x, w_iok, b, k=4, s=2, p=1):
        w_oik = jnp.flip(w_iok, axis=2).transpose(1, 0, 2)
        y = lax.conv_general_dilated(x, w_oik, window_strides=(1,),
                                     padding=[(k - 1 - p, k - 1 - p)],
                                     lhs_dilation=(s,),
                                     dimension_numbers=('NCH', 'OIH', 'NCH'))
        return y + b[None, :, None]

    w1_oik = jnp.transpose(params['w1'], (2, 1, 0))              # (H, Cin, 3)
    h = conv1d(x_ncl, w1_oik, params['b1'][0])
    for l in range(num_residual_layers):
        w3_oik = jnp.transpose(params['rw3'][l], (2, 1, 0))      # (R, H, 3)
        w1x1_oik = jnp.transpose(params['rw1'][l], (1, 0))[:, :, None]  # (H, R, 1)
        t = conv1d(jax.nn.relu(h), w3_oik)
        t = conv1d(jax.nn.relu(t), w1x1_oik, pad=0)
        h = h + t
    h = jax.nn.relu(h)
    w_t1_iok = jnp.transpose(params['t1w'], (1, 2, 0))           # (H, H2, 4)
    h = jax.nn.relu(conv_t1d(h, w_t1_iok, params['t1b'][0]))
    w_t2_iok = jnp.transpose(params['t2w'], (1, 2, 0))           # (H2, 3, 4)
    return conv_t1d(h, w_t2_iok, params['t2b'][0])


# ------------------------------------------------------------------ main ----
if __name__ == "__main__":
    # Small but lane-friendly demo: TB*L = 256 lanes (multiple of 256) and
    # G = 2 so the "parallel" batch axis actually lands on both v7x TCs.
    B, Cin, L = 4, 8, 128       # batch, in_channels, sequence length
    H, NL, R = 32, 2, 8         # num_hiddens, num_residual_layers, num_residual_hiddens
    H2 = H // 2

    key = jax.random.PRNGKey(0)
    ks = jax.random.split(key, 9)
    params = {
        'w1':  0.1 * jax.random.normal(ks[0], (3, Cin, H), jnp.float32),
        'b1':  0.1 * jax.random.normal(ks[1], (1, H), jnp.float32),
        'rw3': 0.1 * jax.random.normal(ks[2], (NL, 3, H, R), jnp.float32),
        'rw1': 0.1 * jax.random.normal(ks[3], (NL, R, H), jnp.float32),
        't1w': 0.1 * jax.random.normal(ks[4], (4, H, H2), jnp.float32),
        't1b': 0.1 * jax.random.normal(ks[5], (1, H2), jnp.float32),
        't2w': 0.1 * jax.random.normal(ks[6], (4, H2, 3), jnp.float32),
        't2b': 0.1 * jax.random.normal(ks[7], (1, 3), jnp.float32),
    }
    x = jax.random.normal(ks[8], (B, Cin, L), jnp.float32)

    y = jax.jit(imu_decoder_forward)(x, params)
    y = jax.block_until_ready(y)
    assert y.shape == (B, 3, 4 * L), y.shape

    y_ref = reference_forward(x, params, num_residual_layers=NL)
    # Tolerance covers the explicit bf16 MXU inputs (accumulation stays f32).
    if not jnp.allclose(y, y_ref, atol=2e-2, rtol=2e-2):
        max_err = jnp.max(jnp.abs(y - y_ref))
        raise AssertionError(f"Pallas kernel mismatch, max abs err = {max_err}")

    print("KERNEL_OK")
</pallas_src>

<mosaic_0001>
module attributes {stable_mosaic.version = 11 : i64} {
  func.func @kernel(%arg0: i32, %arg1: memref<1x8x256xf32, #tpu.memory_space<vmem>>, %arg2: memref<3x32x8xbf16, #tpu.memory_space<vmem>>, %arg3: memref<32x1xf32, #tpu.memory_space<vmem>>, %arg4: memref<2x3x8x32xbf16, #tpu.memory_space<vmem>>, %arg5: memref<2x32x8xbf16, #tpu.memory_space<vmem>>, %arg6: memref<4x16x32xbf16, #tpu.memory_space<vmem>>, %arg7: memref<16x1xf32, #tpu.memory_space<vmem>>, %arg8: memref<4x16x16xbf16, #tpu.memory_space<vmem>>, %arg9: memref<16x1xf32, #tpu.memory_space<vmem>>, %arg10: memref<1x16x256xf32, #tpu.memory_space<vmem>>) attributes {dimension_semantics = [#tpu.dimension_semantics<parallel>], iteration_bounds = array<i64: 2>, scalar_prefetch = 0 : i64, scratch_operands = 0 : i64, tpu.core_type = #tpu.core_type<tc>, window_params = [{transform_indices = @transform_0, window_bounds = array<i64: 1, 8, 256>}, {pipeline_mode = #tpu.pipeline_mode<synchronous>, transform_indices = @transform_1, window_bounds = array<i64: 3, 32, 8>}, {pipeline_mode = #tpu.pipeline_mode<synchronous>, transform_indices = @transform_2, window_bounds = array<i64: 32, 1>}, {pipeline_mode = #tpu.pipeline_mode<synchronous>, transform_indices = @transform_3, window_bounds = array<i64: 2, 3, 8, 32>}, {pipeline_mode = #tpu.pipeline_mode<synchronous>, transform_indices = @transform_4, window_bounds = array<i64: 2, 32, 8>}, {pipeline_mode = #tpu.pipeline_mode<synchronous>, transform_indices = @transform_5, window_bounds = array<i64: 4, 16, 32>}, {pipeline_mode = #tpu.pipeline_mode<synchronous>, transform_indices = @transform_6, window_bounds = array<i64: 16, 1>}, {pipeline_mode = #tpu.pipeline_mode<synchronous>, transform_indices = @transform_7, window_bounds = array<i64: 4, 16, 16>}, {pipeline_mode = #tpu.pipeline_mode<synchronous>, transform_indices = @transform_8, window_bounds = array<i64: 16, 1>}, {transform_indices = @transform_9, window_bounds = array<i64: 1, 16, 256>}]} {
    %0 = tpu.iota {dimensions = array<i32: 1>} : vector<1x256xi32>
    %c128_i32 = arith.constant 128 : i32
    %c0_i32 = arith.constant 0 : i32
    %1 = arith.cmpi eq, %c128_i32, %c0_i32 : i32
    %c1_i32 = arith.constant 1 : i32
    %2 = arith.select %1, %c1_i32, %c128_i32 : i32
    %3 = vector.broadcast %2 : i32 to vector<1x256xi32>
    %4 = arith.remsi %0, %3 : vector<1x256xi32>
    %c0_i32_0 = arith.constant 0 : i32
    %5 = vector.broadcast %c0_i32_0 : i32 to vector<1x256xi32>
    %6 = arith.cmpi ne, %4, %5 : vector<1x256xi32>
    %c0_i32_1 = arith.constant 0 : i32
    %7 = vector.broadcast %c0_i32_1 : i32 to vector<1x256xi32>
    %8 = arith.cmpi slt, %4, %7 : vector<1x256xi32>
    %c0_i32_2 = arith.constant 0 : i32
    %9 = arith.cmpi slt, %2, %c0_i32_2 : i32
    %10 = vector.broadcast %9 : i1 to vector<1x256xi1>
    %11 = vector.broadcast %10 : vector<1x256xi1> to vector<1x256xi1>
    %12 = arith.xori %8, %11 : vector<1x256xi1>
    %13 = arith.andi %12, %6 : vector<1x256xi1>
    %14 = vector.broadcast %2 : i32 to vector<1x256xi32>
    %15 = arith.addi %4, %14 : vector<1x256xi32>
    %16 = arith.select %13, %15, %4 : vector<1x256xi1>, vector<1x256xi32>
    %c0_i32_3 = arith.constant 0 : i32
    %17 = vector.broadcast %c0_i32_3 : i32 to vector<1x256xi32>
    %18 = arith.cmpi ne, %16, %17 : vector<1x256xi32>
    %c127_i32 = arith.constant 127 : i32
    %19 = vector.broadcast %c127_i32 : i32 to vector<1x256xi32>
    %20 = arith.cmpi ne, %16, %19 : vector<1x256xi32>
    %c0 = arith.constant 0 : index
    %c0_4 = arith.constant 0 : index
    %c0_5 = arith.constant 0 : index
    %21 = vector.load %arg1[%c0, %c0_4, %c0_5] : memref<1x8x256xf32, #tpu.memory_space<vmem>>, vector<1x8x256xf32>
    %22 = vector.shape_cast %21 : vector<1x8x256xf32> to vector<8x256xf32>
    %c1 = arith.constant 1 : index
    %c0_6 = arith.constant 0 : index
    %c0_7 = arith.constant 0 : index
    %23 = vector.load %arg2[%c1, %c0_6, %c0_7] : memref<3x32x8xbf16, #tpu.memory_space<vmem>>, vector<1x32x8xbf16>
    %24 = vector.shape_cast %23 : vector<1x32x8xbf16> to vector<32x8xbf16>
    %25 = arith.truncf %22 : vector<8x256xf32> to vector<8x256xbf16>
    %cst = arith.constant dense<0.000000e+00> : vector<32x256xf32>
    %26 = tpu.matmul %24, %25, %cst {dimension_numbers = #tpu.dot_dimension_numbers<[1], [0], [0], [1], [0, 0, 1, 1], [], []>} : vector<32x8xbf16>, vector<8x256xbf16>, vector<32x256xf32> -> vector<32x256xf32>
    %c0_8 = arith.constant 0 : index
    %c0_9 = arith.constant 0 : index
    %c0_10 = arith.constant 0 : index
    %27 = vector.load %arg2[%c0_8, %c0_9, %c0_10] : memref<3x32x8xbf16, #tpu.memory_space<vmem>>, vector<1x32x8xbf16>
    %28 = vector.shape_cast %27 : vector<1x32x8xbf16> to vector<32x8xbf16>
    %c1_i32_11 = arith.constant 1 : i32
    %29 = tpu.dynamic_rotate %22 by %c1_i32_11 dim 1 : vector<8x256xf32>, i32 -> vector<8x256xf32>
    %cst_12 = arith.constant 0.000000e+00 : f32
    %30 = vector.shape_cast %18 : vector<1x256xi1> to vector<1x256xi1>
    %31 = vector.broadcast %30 : vector<1x256xi1> to vector<8x256xi1>
    %32 = vector.broadcast %cst_12 : f32 to vector<8x256xf32>
    %33 = arith.select %31, %29, %32 : vector<8x256xi1>, vector<8x256xf32>
    %34 = arith.truncf %33 : vector<8x256xf32> to vector<8x256xbf16>
    %cst_13 = arith.constant dense<0.000000e+00> : vector<32x256xf32>
    %35 = tpu.matmul %28, %34, %cst_13 {dimension_numbers = #tpu.dot_dimension_numbers<[1], [0], [0], [1], [0, 0, 1, 1], [], []>} : vector<32x8xbf16>, vector<8x256xbf16>, vector<32x256xf32> -> vector<32x256xf32>
    %36 = arith.addf %26, %35 : vector<32x256xf32>
    %c2 = arith.constant 2 : index
    %c0_14 = arith.constant 0 : index
    %c0_15 = arith.constant 0 : index
    %37 = vector.load %arg2[%c2, %c0_14, %c0_15] : memref<3x32x8xbf16, #tpu.memory_space<vmem>>, vector<1x32x8xbf16>
    %38 = vector.shape_cast %37 : vector<1x32x8xbf16> to vector<32x8xbf16>
    %c255_i32 = arith.constant 255 : i32
    %39 = tpu.dynamic_rotate %22 by %c255_i32 dim 1 : vector<8x256xf32>, i32 -> vector<8x256xf32>
    %cst_16 = arith.constant 0.000000e+00 : f32
    %40 = vector.shape_cast %20 : vector<1x256xi1> to vector<1x256xi1>
    %41 = vector.broadcast %40 : vector<1x256xi1> to vector<8x256xi1>
    %42 = vector.broadcast %cst_16 : f32 to vector<8x256xf32>
    %43 = arith.select %41, %39, %42 : vector<8x256xi1>, vector<8x256xf32>
    %44 = arith.truncf %43 : vector<8x256xf32> to vector<8x256xbf16>
    %cst_17 = arith.constant dense<0.000000e+00> : vector<32x256xf32>
    %45 = tpu.matmul %38, %44, %cst_17 {dimension_numbers = #tpu.dot_dimension_numbers<[1], [0], [0], [1], [0, 0, 1, 1], [], []>} : vector<32x8xbf16>, vector<8x256xbf16>, vector<32x256xf32> -> vector<32x256xf32>
    %46 = arith.addf %36, %45 : vector<32x256xf32>
    %c0_18 = arith.constant 0 : index
    %c0_19 = arith.constant 0 : index
    %47 = vector.load %arg3[%c0_18, %c0_19] : memref<32x1xf32, #tpu.memory_space<vmem>>, vector<32x1xf32>
    %48 = vector.broadcast %47 : vector<32x1xf32> to vector<32x256xf32>
    %49 = arith.addf %46, %48 : vector<32x256xf32>
    %cst_20 = arith.constant 0.000000e+00 : f32
    %50 = vector.broadcast %cst_20 : f32 to vector<32x256xf32>
    %51 = arith.maximumf %49, %50 : vector<32x256xf32>
    %c0_21 = arith.constant 0 : index
    %c1_22 = arith.constant 1 : index
    %c0_23 = arith.constant 0 : index
    %c0_24 = arith.constant 0 : index
    %52 = vector.load %arg4[%c0_21, %c1_22, %c0_23, %c0_24] : memref<2x3x8x32xbf16, #tpu.memory_space<vmem>>, vector<1x1x8x32xbf16>
    %53 = vector.shape_cast %52 : vector<1x1x8x32xbf16> to vector<8x32xbf16>
    %54 = arith.truncf %51 : vector<32x256xf32> to vector<32x256xbf16>
    %cst_25 = arith.constant dense<0.000000e+00> : vector<8x256xf32>
    %55 = tpu.matmul %53, %54, %cst_25 {dimension_numbers = #tpu.dot_dimension_numbers<[1], [0], [0], [1], [0, 0, 1, 1], [], []>} : vector<8x32xbf16>, vector<32x256xbf16>, vector<8x256xf32> -> vector<8x256xf32>
    %c0_26 = arith.constant 0 : index
    %c0_27 = arith.constant 0 : index
    %c0_28 = arith.constant 0 : index
    %c0_29 = arith.constant 0 : index
    %56 = vector.load %arg4[%c0_26, %c0_27, %c0_28, %c0_29] : memref<2x3x8x32xbf16, #tpu.memory_space<vmem>>, vector<1x1x8x32xbf16>
    %57 = vector.shape_cast %56 : vector<1x1x8x32xbf16> to vector<8x32xbf16>
    %c1_i32_30 = arith.constant 1 : i32
    %58 = tpu.dynamic_rotate %51 by %c1_i32_30 dim 1 : vector<32x256xf32>, i32 -> vector<32x256xf32>
    %cst_31 = arith.constant 0.000000e+00 : f32
    %59 = vector.shape_cast %18 : vector<1x256xi1> to vector<1x256xi1>
    %60 = vector.broadcast %59 : vector<1x256xi1> to vector<32x256xi1>
    %61 = vector.broadcast %cst_31 : f32 to vector<32x256xf32>
    %62 = arith.select %60, %58, %61 : vector<32x256xi1>, vector<32x256xf32>
    %63 = arith.truncf %62 : vector<32x256xf32> to vector<32x256xbf16>
    %cst_32 = arith.constant dense<0.000000e+00> : vector<8x256xf32>
    %64 = tpu.matmul %57, %63, %cst_32 {dimension_numbers = #tpu.dot_dimension_numbers<[1], [0], [0], [1], [0, 0, 1, 1], [], []>} : vector<8x32xbf16>, vector<32x256xbf16>, vector<8x256xf32> -> vector<8x256xf32>
    %65 = arith.addf %55, %64 : vector<8x256xf32>
    %c0_33 = arith.constant 0 : index
    %c2_34 = arith.constant 2 : index
    %c0_35 = arith.constant 0 : index
    %c0_36 = arith.constant 0 : index
    %66 = vector.load %arg4[%c0_33, %c2_34, %c0_35, %c0_36] : memref<2x3x8x32xbf16, #tpu.memory_space<vmem>>, vector<1x1x8x32xbf16>
    %67 = vector.shape_cast %66 : vector<1x1x8x32xbf16> to vector<8x32xbf16>
    %c255_i32_37 = arith.constant 255 : i32
    %68 = tpu.dynamic_rotate %51 by %c255_i32_37 dim 1 : vector<32x256xf32>, i32 -> vector<32x256xf32>
    %cst_38 = arith.constant 0.000000e+00 : f32
    %69 = vector.shape_cast %20 : vector<1x256xi1> to vector<1x256xi1>
    %70 = vector.broadcast %69 : vector<1x256xi1> to vector<32x256xi1>
    %71 = vector.broadcast %cst_38 : f32 to vector<32x256xf32>
    %72 = arith.select %70, %68, %71 : vector<32x256xi1>, vector<32x256xf32>
    %73 = arith.truncf %72 : vector<32x256xf32> to vector<32x256xbf16>
    %cst_39 = arith.constant dense<0.000000e+00> : vector<8x256xf32>
    %74 = tpu.matmul %67, %73, %cst_39 {dimension_numbers = #tpu.dot_dimension_numbers<[1], [0], [0], [1], [0, 0, 1, 1], [], []>} : vector<8x32xbf16>, vector<32x256xbf16>, vector<8x256xf32> -> vector<8x256xf32>
    %75 = arith.addf %65, %74 : vector<8x256xf32>
    %cst_40 = arith.constant 0.000000e+00 : f32
    %76 = vector.broadcast %cst_40 : f32 to vector<8x256xf32>
    %77 = arith.maximumf %75, %76 : vector<8x256xf32>
    %c0_41 = arith.constant 0 : index
    %c0_42 = arith.constant 0 : index
    %c0_43 = arith.constant 0 : index
    %78 = vector.load %arg5[%c0_41, %c0_42, %c0_43] : memref<2x32x8xbf16, #tpu.memory_space<vmem>>, vector<1x32x8xbf16>
    %79 = vector.shape_cast %78 : vector<1x32x8xbf16> to vector<32x8xbf16>
    %80 = arith.truncf %77 : vector<8x256xf32> to vector<8x256xbf16>
    %cst_44 = arith.constant dense<0.000000e+00> : vector<32x256xf32>
    %81 = tpu.matmul %79, %80, %cst_44 {dimension_numbers = #tpu.dot_dimension_numbers<[1], [0], [0], [1], [0, 0, 1, 1], [], []>} : vector<32x8xbf16>, vector<8x256xbf16>, vector<32x256xf32> -> vector<32x256xf32>
    %82 = arith.addf %49, %81 : vector<32x256xf32>
    %cst_45 = arith.constant 0.000000e+00 : f32
    %83 = vector.broadcast %cst_45 : f32 to vector<32x256xf32>
    %84 = arith.maximumf %82, %83 : vector<32x256xf32>
    %c1_46 = arith.constant 1 : index
    %c1_47 = arith.constant 1 : index
    %c0_48 = arith.constant 0 : index
    %c0_49 = arith.constant 0 : index
    %85 = vector.load %arg4[%c1_46, %c1_47, %c0_48, %c0_49] : memref<2x3x8x32xbf16, #tpu.memory_space<vmem>>, vector<1x1x8x32xbf16>
    %86 = vector.shape_cast %85 : vector<1x1x8x32xbf16> to vector<8x32xbf16>
    %87 = arith.truncf %84 : vector<32x256xf32> to vector<32x256xbf16>
    %cst_50 = arith.constant dense<0.000000e+00> : vector<8x256xf32>
    %88 = tpu.matmul %86, %87, %cst_50 {dimension_numbers = #tpu.dot_dimension_numbers<[1], [0], [0], [1], [0, 0, 1, 1], [], []>} : vector<8x32xbf16>, vector<32x256xbf16>, vector<8x256xf32> -> vector<8x256xf32>
    %c1_51 = arith.constant 1 : index
    %c0_52 = arith.constant 0 : index
    %c0_53 = arith.constant 0 : index
    %c0_54 = arith.constant 0 : index
    %89 = vector.load %arg4[%c1_51, %c0_52, %c0_53, %c0_54] : memref<2x3x8x32xbf16, #tpu.memory_space<vmem>>, vector<1x1x8x32xbf16>
    %90 = vector.shape_cast %89 : vector<1x1x8x32xbf16> to vector<8x32xbf16>
    %c1_i32_55 = arith.constant 1 : i32
    %91 = tpu.dynamic_rotate %84 by %c1_i32_55 dim 1 : vector<32x256xf32>, i32 -> vector<32x256xf32>
    %cst_56 = arith.constant 0.000000e+00 : f32
    %92 = vector.shape_cast %18 : vector<1x256xi1> to vector<1x256xi1>
    %93 = vector.broadcast %92 : vector<1x256xi1> to vector<32x256xi1>
    %94 = vector.broadcast %cst_56 : f32 to vector<32x256xf32>
    %95 = arith.select %93, %91, %94 : vector<32x256xi1>, vector<32x256xf32>
    %96 = arith.truncf %95 : vector<32x256xf32> to vector<32x256xbf16>
    %cst_57 = arith.constant dense<0.000000e+00> : vector<8x256xf32>
    %97 = tpu.matmul %90, %96, %cst_57 {dimension_numbers = #tpu.dot_dimension_numbers<[1], [0], [0], [1], [0, 0, 1, 1], [], []>} : vector<8x32xbf16>, vector<32x256xbf16>, vector<8x256xf32> -> vector<8x256xf32>
    %98 = arith.addf %88, %97 : vector<8x256xf32>
    %c1_58 = arith.constant 1 : index
    %c2_59 = arith.constant 2 : index
    %c0_60 = arith.constant 0 : index
    %c0_61 = arith.constant 0 : index
    %99 = vector.load %arg4[%c1_58, %c2_59, %c0_60, %c0_61] : memref<2x3x8x32xbf16, #tpu.memory_space<vmem>>, vector<1x1x8x32xbf16>
    %100 = vector.shape_cast %99 : vector<1x1x8x32xbf16> to vector<8x32xbf16>
    %c255_i32_62 = arith.constant 255 : i32
    %101 = tpu.dynamic_rotate %84 by %c255_i32_62 dim 1 : vector<32x256xf32>, i32 -> vector<32x256xf32>
    %cst_63 = arith.constant 0.000000e+00 : f32
    %102 = vector.shape_cast %20 : vector<1x256xi1> to vector<1x256xi1>
    %103 = vector.broadcast %102 : vector<1x256xi1> to vector<32x256xi1>
    %104 = vector.broadcast %cst_63 : f32 to vector<32x256xf32>
    %105 = arith.select %103, %101, %104 : vector<32x256xi1>, vector<32x256xf32>
    %106 = arith.truncf %105 : vector<32x256xf32> to vector<32x256xbf16>
    %cst_64 = arith.constant dense<0.000000e+00> : vector<8x256xf32>
    %107 = tpu.matmul %100, %106, %cst_64 {dimension_numbers = #tpu.dot_dimension_numbers<[1], [0], [0], [1], [0, 0, 1, 1], [], []>} : vector<8x32xbf16>, vector<32x256xbf16>, vector<8x256xf32> -> vector<8x256xf32>
    %108 = arith.addf %98, %107 : vector<8x256xf32>
    %cst_65 = arith.constant 0.000000e+00 : f32
    %109 = vector.broadcast %cst_65 : f32 to vector<8x256xf32>
    %110 = arith.maximumf %108, %109 : vector<8x256xf32>
    %c1_66 = arith.constant 1 : index
    %c0_67 = arith.constant 0 : index
    %c0_68 = arith.constant 0 : index
    %111 = vector.load %arg5[%c1_66, %c0_67, %c0_68] : memref<2x32x8xbf16, #tpu.memory_space<vmem>>, vector<1x32x8xbf16>
    %112 = vector.shape_cast %111 : vector<1x32x8xbf16> to vector<32x8xbf16>
    %113 = arith.truncf %110 : vector<8x256xf32> to vector<8x256xbf16>
    %cst_69 = arith.constant dense<0.000000e+00> : vector<32x256xf32>
    %114 = tpu.matmul %112, %113, %cst_69 {dimension_numbers = #tpu.dot_dimension_numbers<[1], [0], [0], [1], [0, 0, 1, 1], [], []>} : vector<32x8xbf16>, vector<8x256xbf16>, vector<32x256xf32> -> vector<32x256xf32>
    %115 = arith.addf %82, %114 : vector<32x256xf32>
    %cst_70 = arith.constant 0.000000e+00 : f32
    %116 = vector.broadcast %cst_70 : f32 to vector<32x256xf32>
    %117 = arith.maximumf %115, %116 : vector<32x256xf32>
    %c1_71 = arith.constant 1 : index
    %c0_72 = arith.constant 0 : index
    %c0_73 = arith.constant 0 : index
    %118 = vector.load %arg6[%c1_71, %c0_72, %c0_73] : memref<4x16x32xbf16, #tpu.memory_space<vmem>>, vector<1x16x32xbf16>
    %119 = vector.shape_cast %118 : vector<1x16x32xbf16> to vector<16x32xbf16>
    %120 = arith.truncf %117 : vector<32x256xf32> to vector<32x256xbf16>
    %cst_74 = arith.constant dense<0.000000e+00> : vector<16x256xf32>
    %121 = tpu.matmul %119, %120, %cst_74 {dimension_numbers = #tpu.dot_dimension_numbers<[1], [0], [0], [1], [0, 0, 1, 1], [], []>} : vector<16x32xbf16>, vector<32x256xbf16>, vector<16x256xf32> -> vector<16x256xf32>
    %c3 = arith.constant 3 : index
    %c0_75 = arith.constant 0 : index
    %c0_76 = arith.constant 0 : index
    %122 = vector.load %arg6[%c3, %c0_75, %c0_76] : memref<4x16x32xbf16, #tpu.memory_space<vmem>>, vector<1x16x32xbf16>
    %123 = vector.shape_cast %122 : vector<1x16x32xbf16> to vector<16x32xbf16>
    %c1_i32_77 = arith.constant 1 : i32
    %124 = tpu.dynamic_rotate %117 by %c1_i32_77 dim 1 : vector<32x256xf32>, i32 -> vector<32x256xf32>
    %cst_78 = arith.constant 0.000000e+00 : f32
    %125 = vector.shape_cast %18 : vector<1x256xi1> to vector<1x256xi1>
    %126 = vector.broadcast %125 : vector<1x256xi1> to vector<32x256xi1>
    %127 = vector.broadcast %cst_78 : f32 to vector<32x256xf32>
    %128 = arith.select %126, %124, %127 : vector<32x256xi1>, vector<32x256xf32>
    %129 = arith.truncf %128 : vector<32x256xf32> to vector<32x256xbf16>
    %cst_79 = arith.constant dense<0.000000e+00> : vector<16x256xf32>
    %130 = tpu.matmul %123, %129, %cst_79 {dimension_numbers = #tpu.dot_dimension_numbers<[1], [0], [0], [1], [0, 0, 1, 1], [], []>} : vector<16x32xbf16>, vector<32x256xbf16>, vector<16x256xf32> -> vector<16x256xf32>
    %131 = arith.addf %121, %130 : vector<16x256xf32>
    %c0_80 = arith.constant 0 : index
    %c0_81 = arith.constant 0 : index
    %132 = vector.load %arg7[%c0_80, %c0_81] : memref<16x1xf32, #tpu.memory_space<vmem>>, vector<16x1xf32>
    %133 = vector.broadcast %132 : vector<16x1xf32> to vector<16x256xf32>
    %134 = arith.addf %131, %133 : vector<16x256xf32>
    %cst_82 = arith.constant 0.000000e+00 : f32
    %135 = vector.broadcast %cst_82 : f32 to vector<16x256xf32>
    %136 = arith.maximumf %134, %135 : vector<16x256xf32>
    %c2_83 = arith.constant 2 : index
    %c0_84 = arith.constant 0 : index
    %c0_85 = arith.constant 0 : index
    %137 = vector.load %arg6[%c2_83, %c0_84, %c0_85] : memref<4x16x32xbf16, #tpu.memory_space<vmem>>, vector<1x16x32xbf16>
    %138 = vector.shape_cast %137 : vector<1x16x32xbf16> to vector<16x32xbf16>
    %139 = arith.truncf %117 : vector<32x256xf32> to vector<32x256xbf16>
    %cst_86 = arith.constant dense<0.000000e+00> : vector<16x256xf32>
    %140 = tpu.matmul %138, %139, %cst_86 {dimension_numbers = #tpu.dot_dimension_numbers<[1], [0], [0], [1], [0, 0, 1, 1], [], []>} : vector<16x32xbf16>, vector<32x256xbf16>, vector<16x256xf32> -> vector<16x256xf32>
    %c0_87 = arith.constant 0 : index
    %c0_88 = arith.constant 0 : index
    %c0_89 = arith.constant 0 : index
    %141 = vector.load %arg6[%c0_87, %c0_88, %c0_89] : memref<4x16x32xbf16, #tpu.memory_space<vmem>>, vector<1x16x32xbf16>
    %142 = vector.shape_cast %141 : vector<1x16x32xbf16> to vector<16x32xbf16>
    %c255_i32_90 = arith.constant 255 : i32
    %143 = tpu.dynamic_rotate %117 by %c255_i32_90 dim 1 : vector<32x256xf32>, i32 -> vector<32x256xf32>
    %cst_91 = arith.constant 0.000000e+00 : f32
    %144 = vector.shape_cast %20 : vector<1x256xi1> to vector<1x256xi1>
    %145 = vector.broadcast %144 : vector<1x256xi1> to vector<32x256xi1>
    %146 = vector.broadcast %cst_91 : f32 to vector<32x256xf32>
    %147 = arith.select %145, %143, %146 : vector<32x256xi1>, vector<32x256xf32>
    %148 = arith.truncf %147 : vector<32x256xf32> to vector<32x256xbf16>
    %cst_92 = arith.constant dense<0.000000e+00> : vector<16x256xf32>
    %149 = tpu.matmul %142, %148, %cst_92 {dimension_numbers = #tpu.dot_dimension_numbers<[1], [0], [0], [1], [0, 0, 1, 1], [], []>} : vector<16x32xbf16>, vector<32x256xbf16>, vector<16x256xf32> -> vector<16x256xf32>
    %150 = arith.addf %140, %149 : vector<16x256xf32>
    %c0_93 = arith.constant 0 : index
    %c0_94 = arith.constant 0 : index
    %151 = vector.load %arg7[%c0_93, %c0_94] : memref<16x1xf32, #tpu.memory_space<vmem>>, vector<16x1xf32>
    %152 = vector.broadcast %151 : vector<16x1xf32> to vector<16x256xf32>
    %153 = arith.addf %150, %152 : vector<16x256xf32>
    %cst_95 = arith.constant 0.000000e+00 : f32
    %154 = vector.broadcast %cst_95 : f32 to vector<16x256xf32>
    %155 = arith.maximumf %153, %154 : vector<16x256xf32>
    %c0_96 = arith.constant 0 : index
    %c0_97 = arith.constant 0 : index
    %c0_98 = arith.constant 0 : index
    %156 = vector.load %arg8[%c0_96, %c0_97, %c0_98] : memref<4x16x16xbf16, #tpu.memory_space<vmem>>, vector<1x16x16xbf16>
    %157 = vector.shape_cast %156 : vector<1x16x16xbf16> to vector<16x16xbf16>
    %158 = arith.truncf %136 : vector<16x256xf32> to vector<16x256xbf16>
    %cst_99 = arith.constant dense<0.000000e+00> : vector<16x256xf32>
    %159 = tpu.matmul %157, %158, %cst_99 {dimension_numbers = #tpu.dot_dimension_numbers<[1], [0], [0], [1], [0, 0, 1, 1], [], []>} : vector<16x16xbf16>, vector<16x256xbf16>, vector<16x256xf32> -> vector<16x256xf32>
    %c1_100 = arith.constant 1 : index
    %c0_101 = arith.constant 0 : index
    %c0_102 = arith.constant 0 : index
    %160 = vector.load %arg8[%c1_100, %c0_101, %c0_102] : memref<4x16x16xbf16, #tpu.memory_space<vmem>>, vector<1x16x16xbf16>
    %161 = vector.shape_cast %160 : vector<1x16x16xbf16> to vector<16x16xbf16>
    %162 = arith.truncf %155 : vector<16x256xf32> to vector<16x256xbf16>
    %cst_103 = arith.constant dense<0.000000e+00> : vector<16x256xf32>
    %163 = tpu.matmul %161, %162, %cst_103 {dimension_numbers = #tpu.dot_dimension_numbers<[1], [0], [0], [1], [0, 0, 1, 1], [], []>} : vector<16x16xbf16>, vector<16x256xbf16>, vector<16x256xf32> -> vector<16x256xf32>
    %164 = arith.addf %159, %163 : vector<16x256xf32>
    %c2_104 = arith.constant 2 : index
    %c0_105 = arith.constant 0 : index
    %c0_106 = arith.constant 0 : index
    %165 = vector.load %arg8[%c2_104, %c0_105, %c0_106] : memref<4x16x16xbf16, #tpu.memory_space<vmem>>, vector<1x16x16xbf16>
    %166 = vector.shape_cast %165 : vector<1x16x16xbf16> to vector<16x16xbf16>
    %c1_i32_107 = arith.constant 1 : i32
    %167 = tpu.dynamic_rotate %155 by %c1_i32_107 dim 1 : vector<16x256xf32>, i32 -> vector<16x256xf32>
    %cst_108 = arith.constant 0.000000e+00 : f32
    %168 = vector.shape_cast %18 : vector<1x256xi1> to vector<1x256xi1>
    %169 = vector.broadcast %168 : vector<1x256xi1> to vector<16x256xi1>
    %170 = vector.broadcast %cst_108 : f32 to vector<16x256xf32>
    %171 = arith.select %169, %167, %170 : vector<16x256xi1>, vector<16x256xf32>
    %172 = arith.truncf %171 : vector<16x256xf32> to vector<16x256xbf16>
    %cst_109 = arith.constant dense<0.000000e+00> : vector<16x256xf32>
    %173 = tpu.matmul %166, %172, %cst_109 {dimension_numbers = #tpu.dot_dimension_numbers<[1], [0], [0], [1], [0, 0, 1, 1], [], []>} : vector<16x16xbf16>, vector<16x256xbf16>, vector<16x256xf32> -> vector<16x256xf32>
    %174 = arith.addf %164, %173 : vector<16x256xf32>
    %c3_110 = arith.constant 3 : index
    %c0_111 = arith.constant 0 : index
    %c0_112 = arith.constant 0 : index
    %175 = vector.load %arg8[%c3_110, %c0_111, %c0_112] : memref<4x16x16xbf16, #tpu.memory_space<vmem>>, vector<1x16x16xbf16>
    %176 = vector.shape_cast %175 : vector<1x16x16xbf16> to vector<16x16xbf16>
    %c255_i32_113 = arith.constant 255 : i32
    %177 = tpu.dynamic_rotate %136 by %c255_i32_113 dim 1 : vector<16x256xf32>, i32 -> vector<16x256xf32>
    %cst_114 = arith.constant 0.000000e+00 : f32
    %178 = vector.shape_cast %20 : vector<1x256xi1> to vector<1x256xi1>
    %179 = vector.broadcast %178 : vector<1x256xi1> to vector<16x256xi1>
    %180 = vector.broadcast %cst_114 : f32 to vector<16x256xf32>
    %181 = arith.select %179, %177, %180 : vector<16x256xi1>, vector<16x256xf32>
    %182 = arith.truncf %181 : vector<16x256xf32> to vector<16x256xbf16>
    %cst_115 = arith.constant dense<0.000000e+00> : vector<16x256xf32>
    %183 = tpu.matmul %176, %182, %cst_115 {dimension_numbers = #tpu.dot_dimension_numbers<[1], [0], [0], [1], [0, 0, 1, 1], [], []>} : vector<16x16xbf16>, vector<16x256xbf16>, vector<16x256xf32> -> vector<16x256xf32>
    %184 = arith.addf %174, %183 : vector<16x256xf32>
    %c0_116 = arith.constant 0 : index
    %c0_117 = arith.constant 0 : index
    %185 = vector.load %arg9[%c0_116, %c0_117] : memref<16x1xf32, #tpu.memory_space<vmem>>, vector<16x1xf32>
    %186 = vector.broadcast %185 : vector<16x1xf32> to vector<16x256xf32>
    %187 = arith.addf %184, %186 : vector<16x256xf32>
    %c0_118 = arith.constant 0 : index
    %c0_119 = arith.constant 0 : index
    %c0_120 = arith.constant 0 : index
    %188 = vector.load %arg10[%c0_118, %c0_119, %c0_120] : memref<1x16x256xf32, #tpu.memory_space<vmem>>, vector<1x16x256xf32>
    %189 = vector.shape_cast %188 : vector<1x16x256xf32> to vector<16x256xf32>
    %190 = vector.shape_cast %187 : vector<16x256xf32> to vector<1x16x256xf32>
    tpu.vector_store %arg10[%c0_118, %c0_119, %c0_120], %190 {strides = array<i32>} : memref<1x16x256xf32, #tpu.memory_space<vmem>>, vector<1x16x256xf32>,
    return
  }
  func.func @transform_0(%arg0: i32) -> (i32, i32, i32) {
    %c0_i32 = arith.constant 0 : i32
    %c0_i32_0 = arith.constant 0 : i32
    %c0_i32_1 = arith.constant 0 : i32
    return %arg0, %c0_i32, %c0_i32_0 : i32, i32, i32
  }
  func.func @transform_1(%arg0: i32) -> (i32, i32, i32) {
    %c0_i32 = arith.constant 0 : i32
    %c0_i32_0 = arith.constant 0 : i32
    %c0_i32_1 = arith.constant 0 : i32
    %c0_i32_2 = arith.constant 0 : i32
    return %c0_i32, %c0_i32_0, %c0_i32_1 : i32, i32, i32
  }
  func.func @transform_2(%arg0: i32) -> (i32, i32) {
    %c0_i32 = arith.constant 0 : i32
    %c0_i32_0 = arith.constant 0 : i32
    %c0_i32_1 = arith.constant 0 : i32
    return %c0_i32, %c0_i32_0 : i32, i32
  }
  func.func @transform_3(%arg0: i32) -> (i32, i32, i32, i32) {
    %c0_i32 = arith.constant 0 : i32
    %c0_i32_0 = arith.constant 0 : i32
    %c0_i32_1 = arith.constant 0 : i32
    %c0_i32_2 = arith.constant 0 : i32
    %c0_i32_3 = arith.constant 0 : i32
    return %c0_i32, %c0_i32_0, %c0_i32_1, %c0_i32_2 : i32, i32, i32, i32
  }
  func.func @transform_4(%arg0: i32) -> (i32, i32, i32) {
    %c0_i32 = arith.constant 0 : i32
    %c0_i32_0 = arith.constant 0 : i32
    %c0_i32_1 = arith.constant 0 : i32
    %c0_i32_2 = arith.constant 0 : i32
    return %c0_i32, %c0_i32_0, %c0_i32_1 : i32, i32, i32
  }
  func.func @transform_5(%arg0: i32) -> (i32, i32, i32) {
    %c0_i32 = arith.constant 0 : i32
    %c0_i32_0 = arith.constant 0 : i32
    %c0_i32_1 = arith.constant 0 : i32
    %c0_i32_2 = arith.constant 0 : i32
    return %c0_i32, %c0_i32_0, %c0_i32_1 : i32, i32, i32
  }
  func.func @transform_6(%arg0: i32) -> (i32, i32) {
    %c0_i32 = arith.constant 0 : i32
    %c0_i32_0 = arith.constant 0 : i32
    %c0_i32_1 = arith.constant 0 : i32
    return %c0_i32, %c0_i32_0 : i32, i32
  }
  func.func @transform_7(%arg0: i32) -> (i32, i32, i32) {
    %c0_i32 = arith.constant 0 : i32
    %c0_i32_0 = arith.constant 0 : i32
    %c0_i32_1 = arith.constant 0 : i32
    %c0_i32_2 = arith.constant 0 : i32
    return %c0_i32, %c0_i32_0, %c0_i32_1 : i32, i32, i32
  }
  func.func @transform_8(%arg0: i32) -> (i32, i32) {
    %c0_i32 = arith.constant 0 : i32
    %c0_i32_0 = arith.constant 0 : i32
    %c0_i32_1 = arith.constant 0 : i32
    return %c0_i32, %c0_i32_0 : i32, i32
  }
  func.func @transform_9(%arg0: i32) -> (i32, i32, i32) {
    %c0_i32 = arith.constant 0 : i32
    %c0_i32_0 = arith.constant 0 : i32
    %c0_i32_1 = arith.constant 0 : i32
    return %arg0, %c0_i32, %c0_i32_0 : i32, i32, i32
  }
}

</mosaic_0001>

<llo_original>
// kernel: imu_decoder_forward.1
$region0: #{imu_decoder_forward.1}
  #allocation0 [shape = 'u32[]', space=smem, size = 0x4, offset = 0x4, fixed_abs, tag = 'smem constant byte address 0x4 - core index']
  #allocation1 [shape = 'u32[144,128]{1,0:T(1,128)}', space=vmem, size = 0x12000, scoped, tag = 'internal scratch']
  %s0 = inlined_call_operand.vmem [shape: f32[2,8,256], index: 0, kind: input, shape index: {}]
  %s1 = inlined_call_operand.vmem [shape: bf16[3,32,8], index: 1, kind: input, shape index: {}]
  %s2 = inlined_call_operand.vmem [shape: f32[32,1], index: 2, kind: input, shape index: {}]
  %s3 = inlined_call_operand.vmem [shape: bf16[2,3,8,32], index: 3, kind: input, shape index: {}]
  %s4 = inlined_call_operand.vmem [shape: bf16[2,32,8], index: 4, kind: input, shape index: {}]
  %s5 = inlined_call_operand.vmem [shape: bf16[4,16,32], index: 5, kind: input, shape index: {}]
  %s6 = inlined_call_operand.vmem [shape: f32[16,1], index: 6, kind: input, shape index: {}]
  %s7 = inlined_call_operand.vmem [shape: bf16[4,16,16], index: 7, kind: input, shape index: {}]
  %s8 = inlined_call_operand.vmem [shape: f32[16,1], index: 8, kind: input, shape index: {}]
  %s9 = inlined_call_operand.vmem [shape: f32[2,16,256], index: 9, kind: output, shape index: {}]
  %s10 = sld [smem:[#allocation0]]
  $region69: #{imu_decoder_forward.1} parent=0
    _
  %s12 = ssub.s32 1, %s10
  %s13 = scalar_select 0, %s12, %s10
  loop: start=0, step=1, limit=4
  $region2: #{imu_decoder_forward.1} parent=0 // loop_pre_header
    _
  $region3: #{imu_decoder_forward.1} parent=0 // loop_header
    %s15 = sphi 0, %s19
    %p16 = scmp.ge.s32.totalorder %s15, 4
    %s25 = sphi 0, %s27
    %s28 = sphi 0, %s25
    %s29 = sphi 0, %s28
    %s45 = sphi 0, %s29
    %s49 = sphi 0, %s49
    %s51 = sphi 0, %s49
    %s52 = sphi 0, %s51
    %s66 = sphi 0, %s52
    %s70 = sphi 0, %s70
    %s72 = sphi 0, %s70
    %s73 = sphi 0, %s72
    %s87 = sphi 0, %s73
    %s91 = sphi 0, %s91
    %s93 = sphi 0, %s91
    %s94 = sphi 0, %s93
    %s108 = sphi 0, %s94
    %s112 = sphi 0, %s112
    %s114 = sphi 0, %s112
    %s115 = sphi 0, %s114
    %s129 = sphi 0, %s115
    %s133 = sphi 0, %s133
    %s135 = sphi 0, %s133
    %s136 = sphi 0, %s135
    %s150 = sphi 0, %s136
    %s154 = sphi 0, %s154
    %s156 = sphi 0, %s154
    %s157 = sphi 0, %s156
    %s171 = sphi 0, %s157
    %s175 = sphi 0, %s175
    %s177 = sphi 0, %s175
    %s178 = sphi 0, %s177
    %s192 = sphi 0, %s178
    %s196 = sphi 0, %s196
    %s198 = sphi 0, %s196
    %s199 = sphi 0, %s198
    %s213 = sphi 0, %s199
    %s219 = sphi 0, %s221
    %s222 = sphi 0, %s219
    %s223 = sphi 0, %s222
    %s239 = sphi 0, %s223
  $region4: #{imu_decoder_forward.1} parent=0 // loop_header_branch
    %18 = sbr.rel (%p16) target = $region8
  $region5: #{imu_decoder_forward.1} parent=0 // loop_body
    %s20 = ssub.s32 %s15, 1
    %s21 = ssub.s32 %s15, 2
    %s22 = sadd.s32 %s15, 1
    %s23 = ssub.s32 %s15, %s22
    %p24 = scmp.eq.s32.totalorder %s23, 0
    %s26 = sadd.s32 %s25, 1
    %s27 = scalar_select %p24, %s25, %s26
    %p30 = pneg %p24
    %p31 = scmp.eq.s32.totalorder %s15, 1
    %p32 = por %p30, %p31
    %p33 = scmp.ne.s32.totalorder %s25, %s28
    %p34 = scmp.eq.s32.totalorder %s15, 0
    %p35 = por %p33, %p34
    %p36 = scmp.ne.s32.totalorder %s25, %s28
    %p37 = scmp.eq.s32.totalorder %s20, 1
    %p38 = por %p36, %p37
    %p39 = scmp.ne.s32.totalorder %s28, %s29
    %p40 = scmp.eq.s32.totalorder %s20, 0
    %p41 = por %p39, %p40
    %p42 = scmp.ne.s32.totalorder %s28, %s29
    %p43 = scmp.eq.s32.totalorder %s21, 1
    %p44 = por %p42, %p43
    %p46 = scmp.ne.s32.totalorder %s29, %s45
    %p47 = scmp.eq.s32.totalorder %s21, 0
    %p48 = por %p46, %p47
    %s50 = sadd.s32 %s49, 1
    %p53 = scmp.eq.s32.totalorder %s15, 1
    %p54 = scmp.ne.s32.totalorder %s49, %s51
    %p55 = scmp.eq.s32.totalorder %s15, 0
    %p56 = por %p54, %p55
    %p57 = scmp.ne.s32.totalorder %s49, %s51
    %p58 = scmp.eq.s32.totalorder %s20, 1
    %p59 = por %p57, %p58
    %p60 = scmp.ne.s32.totalorder %s51, %s52
    %p61 = scmp.eq.s32.totalorder %s20, 0
    %p62 = por %p60, %p61
    %p63 = scmp.ne.s32.totalorder %s51, %s52
    %p64 = scmp.eq.s32.totalorder %s21, 1
    %p65 = por %p63, %p64
    %p67 = scmp.ne.s32.totalorder %s52, %s66
    %p68 = scmp.eq.s32.totalorder %s21, 0
    %p69 = por %p67, %p68
    %s71 = sadd.s32 %s70, 1
    %p74 = scmp.eq.s32.totalorder %s15, 1
    %p75 = scmp.ne.s32.totalorder %s70, %s72
    %p76 = scmp.eq.s32.totalorder %s15, 0
    %p77 = por %p75, %p76
    %p78 = scmp.ne.s32.totalorder %s70, %s72
    %p79 = scmp.eq.s32.totalorder %s20, 1
    %p80 = por %p78, %p79
    %p81 = scmp.ne.s32.totalorder %s72, %s73
    %p82 = scmp.eq.s32.totalorder %s20, 0
    %p83 = por %p81, %p82
    %p84 = scmp.ne.s32.totalorder %s72, %s73
    %p85 = scmp.eq.s32.totalorder %s21, 1
    %p86 = por %p84, %p85
    %p88 = scmp.ne.s32.totalorder %s73, %s87
    %p89 = scmp.eq.s32.totalorder %s21, 0
    %p90 = por %p88, %p89
    %s92 = sadd.s32 %s91, 1
    %p95 = scmp.eq.s32.totalorder %s15, 1
    %p96 = scmp.ne.s32.totalorder %s91, %s93
    %p97 = scmp.eq.s32.totalorder %s15, 0
    %p98 = por %p96, %p97
    %p99 = scmp.ne.s32.totalorder %s91, %s93
    %p100 = scmp.eq.s32.totalorder %s20, 1
    %p101 = por %p99, %p100
    %p102 = scmp.ne.s32.totalorder %s93, %s94
    %p103 = scmp.eq.s32.totalorder %s20, 0
    %p104 = por %p102, %p103
    %p105 = scmp.ne.s32.totalorder %s93, %s94
    %p106 = scmp.eq.s32.totalorder %s21, 1
    %p107 = por %p105, %p106
    %p109 = scmp.ne.s32.totalorder %s94, %s108
    %p110 = scmp.eq.s32.totalorder %s21, 0
    %p111 = por %p109, %p110
    %s113 = sadd.s32 %s112, 1
    %p116 = scmp.eq.s32.totalorder %s15, 1
    %p117 = scmp.ne.s32.totalorder %s112, %s114
    %p118 = scmp.eq.s32.totalorder %s15, 0
    %p119 = por %p117, %p118
    %p120 = scmp.ne.s32.totalorder %s112, %s114
    %p121 = scmp.eq.s32.totalorder %s20, 1
    %p122 = por %p120, %p121
    %p123 = scmp.ne.s32.totalorder %s114, %s115
    %p124 = scmp.eq.s32.totalorder %s20, 0
    %p125 = por %p123, %p124
    %p126 = scmp.ne.s32.totalorder %s114, %s115
    %p127 = scmp.eq.s32.totalorder %s21, 1
    %p128 = por %p126, %p127
    %p130 = scmp.ne.s32.totalorder %s115, %s129
    %p131 = scmp.eq.s32.totalorder %s21, 0
    %p132 = por %p130, %p131
    %s134 = sadd.s32 %s133, 1
    %p137 = scmp.eq.s32.totalorder %s15, 1
    %p138 = scmp.ne.s32.totalorder %s133, %s135
    %p139 = scmp.eq.s32.totalorder %s15, 0
    %p140 = por %p138, %p139
    %p141 = scmp.ne.s32.totalorder %s133, %s135
    %p142 = scmp.eq.s32.totalorder %s20, 1
    %p143 = por %p141, %p142
    %p144 = scmp.ne.s32.totalorder %s135, %s136
    %p145 = scmp.eq.s32.totalorder %s20, 0
    %p146 = por %p144, %p145
    %p147 = scmp.ne.s32.totalorder %s135, %s136
    %p148 = scmp.eq.s32.totalorder %s21, 1
    %p149 = por %p147, %p148
    %p151 = scmp.ne.s32.totalorder %s136, %s150
    %p152 = scmp.eq.s32.totalorder %s21, 0
    %p153 = por %p151, %p152
    %s155 = sadd.s32 %s154, 1
    %p158 = scmp.eq.s32.totalorder %s15, 1
    %p159 = scmp.ne.s32.totalorder %s154, %s156
    %p160 = scmp.eq.s32.totalorder %s15, 0
    %p161 = por %p159, %p160
    %p162 = scmp.ne.s32.totalorder %s154, %s156
    %p163 = scmp.eq.s32.totalorder %s20, 1
    %p164 = por %p162, %p163
    %p165 = scmp.ne.s32.totalorder %s156, %s157
    %p166 = scmp.eq.s32.totalorder %s20, 0
    %p167 = por %p165, %p166
    %p168 = scmp.ne.s32.totalorder %s156, %s157
    %p169 = scmp.eq.s32.totalorder %s21, 1
    %p170 = por %p168, %p169
    %p172 = scmp.ne.s32.totalorder %s157, %s171
    %p173 = scmp.eq.s32.totalorder %s21, 0
    %p174 = por %p172, %p173
    %s176 = sadd.s32 %s175, 1
    %p179 = scmp.eq.s32.totalorder %s15, 1
    %p180 = scmp.ne.s32.totalorder %s175, %s177
    %p181 = scmp.eq.s32.totalorder %s15, 0
    %p182 = por %p180, %p181
    %p183 = scmp.ne.s32.totalorder %s175, %s177
    %p184 = scmp.eq.s32.totalorder %s20, 1
    %p185 = por %p183, %p184
    %p186 = scmp.ne.s32.totalorder %s177, %s178
    %p187 = scmp.eq.s32.totalorder %s20, 0
    %p188 = por %p186, %p187
    %p189 = scmp.ne.s32.totalorder %s177, %s178
    %p190 = scmp.eq.s32.totalorder %s21, 1
    %p191 = por %p189, %p190
    %p193 = scmp.ne.s32.totalorder %s178, %s192
    %p194 = scmp.eq.s32.totalorder %s21, 0
    %p195 = por %p193, %p194
    %s197 = sadd.s32 %s196, 1
    %p200 = scmp.eq.s32.totalorder %s15, 1
    %p201 = scmp.ne.s32.totalorder %s196, %s198
    %p202 = scmp.eq.s32.totalorder %s15, 0
    %p203 = por %p201, %p202
    %p204 = scmp.ne.s32.totalorder %s196, %s198
    %p205 = scmp.eq.s32.totalorder %s20, 1
    %p206 = por %p204, %p205
    %p207 = scmp.ne.s32.totalorder %s198, %s199
    %p208 = scmp.eq.s32.totalorder %s20, 0
    %p209 = por %p207, %p208
    %p210 = scmp.ne.s32.totalorder %s198, %s199
    %p211 = scmp.eq.s32.totalorder %s21, 1
    %p212 = por %p210, %p211
    %p214 = scmp.ne.s32.totalorder %s199, %s213
    %p215 = scmp.eq.s32.totalorder %s21, 0
    %p216 = por %p214, %p215
    %s217 = ssub.s32 %s15, %s22
    %p218 = scmp.eq.s32.totalorder %s217, 0
    %s220 = sadd.s32 %s219, 1
    %s221 = scalar_select %p218, %s219, %s220
    %p224 = pneg %p218
    %p225 = scmp.eq.s32.totalorder %s15, 1
    %p226 = por %p224, %p225
    %p227 = scmp.ne.s32.totalorder %s219, %s222
    %p228 = scmp.eq.s32.totalorder %s15, 0
    %p229 = por %p227, %p228
    %p230 = scmp.ne.s32.totalorder %s219, %s222
    %p231 = scmp.eq.s32.totalorder %s20, 1
    %p232 = por %p230, %p231
    %p233 = scmp.ne.s32.totalorder %s222, %s223
    %p234 = scmp.eq.s32.totalorder %s20, 0
    %p235 = por %p233, %p234
    %p236 = scmp.ne.s32.totalorder %s222, %s223
    %p237 = scmp.eq.s32.totalorder %s21, 1
    %p238 = por %p236, %p237
    %p240 = scmp.ne.s32.totalorder %s223, %s239
    %p241 = scmp.eq.s32.totalorder %s21, 0
    %p242 = por %p240, %p241
    %p243 = scmp.le.s32.totalorder 1, %s15
    %p244 = scmp.lt.s32.totalorder %s15, 3
    %p245 = pnand %p243, %p244
    %p246 = pneg %p245
    // Predicated region
    $region9: #{imu_decoder_forward.1} parent=5 // pred_check
      _
    $region10: #{imu_decoder_forward.1} parent=5 // pred_check_branch
      %248 = sbr.rel (%p245) target = $region12
    $region11: #{imu_decoder_forward.1} parent=5 // pred_region
      %s249 = ssub.s32 %s15, 1
      // Predicated region
      $region13: #{imu_decoder_forward.1} parent=11 // pred_check
        %p250 = pneg %p62
      $region14: #{imu_decoder_forward.1} parent=11 // pred_check_branch
        %252 = sbr.rel (%p250) target = $region16
      $region15: #{imu_decoder_forward.1} parent=11 // pred_region
        _
      $region16: #{imu_decoder_forward.1} parent=11 // pred_fallthru
        _
      // Predicated region
      $region17: #{imu_decoder_forward.1} parent=11 // pred_check
        %p253 = pneg %p83
      $region18: #{imu_decoder_forward.1} parent=11 // pred_check_branch
        %255 = sbr.rel (%p253) target = $region20
      $region19: #{imu_decoder_forward.1} parent=11 // pred_region
        _
      $region20: #{imu_decoder_forward.1} parent=11 // pred_fallthru
        _
      // Predicated region
      $region21: #{imu_decoder_forward.1} parent=11 // pred_check
        %p256 = pneg %p104
      $region22: #{imu_decoder_forward.1} parent=11 // pred_check_branch
        %258 = sbr.rel (%p256) target = $region24
      $region23: #{imu_decoder_forward.1} parent=11 // pred_region
        _
      $region24: #{imu_decoder_forward.1} parent=11 // pred_fallthru
        _
      // Predicated region
      $region25: #{imu_decoder_forward.1} parent=11 // pred_check
        %p259 = pneg %p125
      $region26: #{imu_decoder_forward.1} parent=11 // pred_check_branch
        %261 = sbr.rel (%p259) target = $region28
      $region27: #{imu_decoder_forward.1} parent=11 // pred_region
        _
      $region28: #{imu_decoder_forward.1} parent=11 // pred_fallthru
        _
      // Predicated region
      $region29: #{imu_decoder_forward.1} parent=11 // pred_check
        %p262 = pneg %p146
      $region30: #{imu_decoder_forward.1} parent=11 // pred_check_branch
        %264 = sbr.rel (%p262) target = $region32
      $region31: #{imu_decoder_forward.1} parent=11 // pred_region
        _
      $region32: #{imu_decoder_forward.1} parent=11 // pred_fallthru
        _
      // Predicated region
      $region33: #{imu_decoder_forward.1} parent=11 // pred_check
        %p265 = pneg %p167
      $region34: #{imu_decoder_forward.1} parent=11 // pred_check_branch
        %267 = sbr.rel (%p265) target = $region36
      $region35: #{imu_decoder_forward.1} parent=11 // pred_region
        _
      $region36: #{imu_decoder_forward.1} parent=11 // pred_fallthru
        _
      // Predicated region
      $region37: #{imu_decoder_forward.1} parent=11 // pred_check
        %p268 = pneg %p188
      $region38: #{imu_decoder_forward.1} parent=11 // pred_check_branch
        %270 = sbr.rel (%p268) target = $region40
      $region39: #{imu_decoder_forward.1} parent=11 // pred_region
        _
      $region40: #{imu_decoder_forward.1} parent=11 // pred_fallthru
        _
      // Predicated region
      $region41: #{imu_decoder_forward.1} parent=11 // pred_check
        %p271 = pneg %p209
      $region42: #{imu_decoder_forward.1} parent=11 // pred_check_branch
        %273 = sbr.rel (%p271) target = $region44
      $region43: #{imu_decoder_forward.1} parent=11 // pred_region
        _
      $region44: #{imu_decoder_forward.1} parent=11 // pred_fallthru
        _
    $region12: #{imu_decoder_forward.1} parent=5 // pred_fallthru
      _
    %p274 = scmp.lt.s32.totalorder %s15, 2
    // Predicated region
    $region45: #{imu_decoder_forward.1} parent=5 // pred_check
      %p275 = pneg %p274
    $region46: #{imu_decoder_forward.1} parent=5 // pred_check_branch
      %277 = sbr.rel (%p275) target = $region48
    $region47: #{imu_decoder_forward.1} parent=5 // pred_region
      // Predicated region
      $region49: #{imu_decoder_forward.1} parent=47 // pred_check
        %p278 = pneg %p35
      $region50: #{imu_decoder_forward.1} parent=47 // pred_check_branch
        %280 = sbr.rel (%p278) target = $region52
      $region51: #{imu_decoder_forward.1} parent=47 // pred_region
        %p281 = scmp.lt.s32.totalorder %s15, 1
        %s282 = scalar_select %p281, %s15, 1
        %s283 = smul.addr %s282, 2
        %s284 = smul.addr %s283, 8
        %s285 = scalar_lea.vmem %s0, %s284
      $region52: #{imu_decoder_forward.1} parent=47 // pred_fallthru
        _
    $region48: #{imu_decoder_forward.1} parent=5 // pred_fallthru
      _
    %p286 = scmp.le.s32.totalorder 1, %s15
    %p287 = scmp.lt.s32.totalorder %s15, 3
    %p288 = pnand %p286, %p287
    %p289 = pneg %p288
    // Predicated region
    $region53: #{imu_decoder_forward.1} parent=5 // pred_check
      _
    $region54: #{imu_decoder_forward.1} parent=5 // pred_check_branch
      %291 = sbr.rel (%p288) target = $region56
    $region55: #{imu_decoder_forward.1} parent=5 // pred_region
      %s292 = ssub.s32 %s15, 1
      %p293 = scmp.lt.s32.totalorder %s20, 1
      %s294 = scalar_select %p293, %s20, 1
      %s295 = smul.addr %s294, 2
      %s296 = smul.addr %s295, 8
      %s297 = scalar_lea.vmem %s0, %s296
      %p298 = pneg %p41
      %p299 = pneg %p38
      %p300 = pneg %p62
      %p301 = pneg %p59
      %p302 = pneg %p83
      %p303 = pneg %p80
      %p304 = pneg %p104
      %p305 = pneg %p101
      %p306 = pneg %p125
      %p307 = pneg %p122
      %p308 = pneg %p146
      %p309 = pneg %p143
      %p310 = pneg %p167
      %p311 = pneg %p164
      %p312 = pneg %p188
      %p313 = pneg %p185
      %p314 = pneg %p209
      %p315 = pneg %p206
      %p316 = pneg %p235
      %p317 = pneg %p232
      %p318 = scmp.lt.s32.totalorder %s20, 1
      %s319 = scalar_select %p318, %s20, 1
      %s320 = smul.addr %s319, 4
      %s321 = smul.addr %s320, 8
      %s322 = scalar_lea.vmem %s9, %s321
      %p323 = scmp.lt.s32.totalorder %s20, 1
      %s324 = scalar_select %p323, %s20, 1
      %s325 = smul.addr %s324, 2
      %s326 = smul.addr %s325, 8
      %s327 = scalar_lea.vmem %s0, %s326
      %p328 = scmp.lt.s32.totalorder %s20, 1
      %s329 = scalar_select %p328, %s20, 1
      %s330 = smul.addr %s329, 4
      %s331 = smul.addr %s330, 8
      %s332 = scalar_lea.vmem %s9, %s331
      %v334 = vlaneseq
      %v335 = vand.u32 %v334, 127
      %v336 = vadd.s32 %v335, 128
      %vm337 = vcmp.lt.s32.totalorder %v335, 0
      %v338 = vsub.s32 0, %v335
      %v339 = vsel %vm337, %v338, %v335
      %v340 = vshrl.u32 %v339, 7
      %v341 = vand.u32 %v339, 127
      %v342 = vsub.s32 0, %v341
      %v343 = vsel %vm337, %v342, %v341
      %vm344 = vcmp.lt.s32.totalorder %v336, 0
      %v345 = vsub.s32 0, %v336
      %v346 = vsel %vm344, %v345, %v336
      %v347 = vshrl.u32 %v346, 7
      %v348 = vand.u32 %v346, 127
      %v349 = vsub.s32 0, %v348
      %v350 = vsel %vm344, %v349, %v348
      %vm351 = vcmp.ne.s32.totalorder %v343, 0
      %vm352 = vcmp.ne.s32.totalorder %v350, 0
      %vm353 = vcmp.lt.s32.totalorder %v343, 0
      %vm354 = vcmp.lt.s32.totalorder %v350, 0
      %vm355 = vmand %vm353, %vm351
      %vm356 = vmand %vm354, %vm352
      %v357 = vadd.s32 %v343, 128
      %v358 = vadd.s32 %v350, 128
      %v359 = vsel %vm355, %v357, %v343
      %v360 = vsel %vm356, %v358, %v350
      %vm361 = vcmp.ne.s32.totalorder %v359, 0
      %vm362 = vcmp.ne.s32.totalorder %v360, 0
      %vm363 = vcmp.ne.s32.totalorder %v359, 127
      %vm364 = vcmp.ne.s32.totalorder %v360, 127
      %v365 = vld [vmem:[%s327] sm:$0xff]
      %v366 = vld [vmem:[%s327 + $0x8] sm:$0xff]
      %s367 = scalar_lea.vmem %s1, 16
      %v368 = vld [vmem:[%s367] sm:$0xf]
      %v369 = vld [vmem:[%s367 + $0x4] sm:$0xf]
      %v370 = vld [vmem:[%s367 + $0x8] sm:$0xf]
      %v371 = vld [vmem:[%s367 + $0xc] sm:$0xf]
      %v372 = vpack.c.bf16 %v365, %v365
      %v373 = vpack.c.bf16 %v366, %v366
      %v374 = vld [vmem:[%s1] sm:$0xf]
      %v375 = vld [vmem:[%s1 + $0x4] sm:$0xf]
      %v376 = vld [vmem:[%s1 + $0x8] sm:$0xf]
      %v377 = vld [vmem:[%s1 + $0xc] sm:$0xf]
      %378 = vrot.lane.b32.xlu0 %v365, 1
      %v379 = vpop.permute.xlu0 %378
      %380 = vrot.lane.b32.xlu0 %v366, 1
      %v381 = vpop.permute.xlu0 %380
      %vm382 = vcmp.lt.s32.totalorder %v335, 1
      %v383 = vsel %vm382, %v379, %v381
      %v384 = vsel %vm382, %v381, %v379
      %v385 = vsel %vm361, 1, 0
      %v386 = vsel %vm362, 1, 0
      %vm387 = vcmp.eq.s32.totalorder %v385, 1
      %vm388 = vcmp.eq.s32.totalorder %v386, 1
      %v389 = vsel %vm387, %v384, 0.0
      %v390 = vsel %vm388, %v383, 0.0
      %v391 = vpack.c.bf16 %v389, %v389
      %v392 = vpack.c.bf16 %v390, %v390
      %v397 = vunpack.c.l.b16 %v374
      %v398 = vunpack.c.l.b16 %v375
      %v399 = vunpack.c.l.b16 %v376
      %v400 = vunpack.c.l.b16 %v377
      %v401 = vpack.c.b16 %v398, %v397
      %v402 = vpack.c.b16 %v400, %v399
      %vm403 = vcmask 64512
      %v405 = vsel %vm403, %v401, 0
      %v408 = vsel %vm403, %v402, 0
      %vm410 = vcmask 1043456
      %v412 = vsel %vm410, %v391, 0
      %v415 = vsel %vm410, %v392, 0
      %417 = vmatprep.subr.bf16.mxu0 %v415
      %418 = vmatpush1.bf16.msra.mxu0 %v412
      %419 = vmatprep.subr.bf16.mxu0 0
      %420 = vmatpush1.bf16.msra.mxu0 0
      %421 = vmatprep.subr.bf16.mxu0 0
      %422 = vmatpush1.bf16.msra.mxu0 0
      %423 = vmatprep.subr.bf16.mxu0 0
      %424 = vmatpush1.bf16.msra.mxu0 0
      %425 = vmatprep.subr.bf16.mxu0 0
      %426 = vmatpush1.bf16.msra.mxu0 0
      %427 = vmatprep.subr.bf16.mxu0 0
      %428 = vmatpush1.bf16.msra.mxu0 0
      %429 = vmatprep.subr.bf16.mxu0 0
      %430 = vmatpush1.bf16.msra.mxu0 0
      %431 = vmatprep.subr.bf16.mxu0 0
      %432 = vmatpush1.bf16.msra.mxu0 0
      %433 = vmatprep.subr.bf16.mxu0 0
      %434 = vmatpush1.bf16.msra.mxu0 0
      %435 = vmatprep.subr.bf16.mxu0 0
      %436 = vmatpush1.bf16.msra.mxu0 0
      %437 = vmatprep.subr.bf16.mxu0 0
      %438 = vmatpush1.bf16.msra.mxu0 0
      %439 = vmatprep.subr.bf16.mxu0 0
      %440 = vmatpush1.bf16.msra.mxu0 0
      %441 = vmatprep.subr.bf16.mxu0 0
      %442 = vmatpush1.bf16.msra.mxu0 0
      %443 = vmatprep.subr.bf16.mxu0 0
      %444 = vmatpush1.bf16.msra.mxu0 0
      %445 = vmatprep.subr.bf16.mxu0 0
      %446 = vmatpush1.bf16.msra.mxu0 0
      %447 = vmatprep.subr.bf16.mxu0 0
      %448 = vmatpush1.bf16.msra.mxu0 0
      %449 = vmatprep.mubr.bf16.mxu0 0
      %450 = vmatmul.mubr.bf16.gmra.mrb[0].mxu0 %v405
      %v451 = vpop.f32.mrb[0].mxu0
      %v452 = vadd.f32 0.0, %v451
      %v453 = vpop.f32.mrb[0].mxu0
      %v454 = vadd.f32 0.0, %v453
      %v455 = vpop.f32.mrb[0].mxu0
      %v456 = vadd.f32 0.0, %v455
      %v457 = vpop.f32.mrb[0].mxu0
      %v458 = vadd.f32 0.0, %v457
      %459 = vmatprep.mubr.bf16.mxu0 0
      %460 = vmatmul.mubr.bf16.gmra.mrb[0].mxu0 %v408
      %v461 = vpop.f32.mrb[0].mxu0
      %v462 = vadd.f32 0.0, %v461
      %v463 = vpop.f32.mrb[0].mxu0
      %v464 = vadd.f32 0.0, %v463
      %v465 = vpop.f32.mrb[0].mxu0
      %v466 = vadd.f32 0.0, %v465
      %v467 = vpop.f32.mrb[0].mxu0
      %v468 = vadd.f32 0.0, %v467
      %469 = vdwg.mxu0
      %v474 = vunpack.c.l.b16 %v368
      %v475 = vunpack.c.l.b16 %v369
      %v476 = vunpack.c.l.b16 %v370
      %v477 = vunpack.c.l.b16 %v371
      %v478 = vpack.c.b16 %v475, %v474
      %v479 = vpack.c.b16 %v477, %v476
      %v481 = vsel %vm403, %v478, 0
      %v484 = vsel %vm403, %v479, 0
      %v487 = vsel %vm410, %v372, 0
      %v490 = vsel %vm410, %v373, 0
      %492 = vmatprep.subr.bf16.mxu0 %v490
      %493 = vmatpush1.bf16.msra.mxu0 %v487
      %494 = vmatprep.subr.bf16.mxu0 0
      %495 = vmatpush1.bf16.msra.mxu0 0
      %496 = vmatprep.subr.bf16.mxu0 0
      %497 = vmatpush1.bf16.msra.mxu0 0
      %498 = vmatprep.subr.bf16.mxu0 0
      %499 = vmatpush1.bf16.msra.mxu0 0
      %500 = vmatprep.subr.bf16.mxu0 0
      %501 = vmatpush1.bf16.msra.mxu0 0
      %502 = vmatprep.subr.bf16.mxu0 0
      %503 = vmatpush1.bf16.msra.mxu0 0
      %504 = vmatprep.subr.bf16.mxu0 0
      %505 = vmatpush1.bf16.msra.mxu0 0
      %506 = vmatprep.subr.bf16.mxu0 0
      %507 = vmatpush1.bf16.msra.mxu0 0
      %508 = vmatprep.subr.bf16.mxu0 0
      %509 = vmatpush1.bf16.msra.mxu0 0
      %510 = vmatprep.subr.bf16.mxu0 0
      %511 = vmatpush1.bf16.msra.mxu0 0
      %512 = vmatprep.subr.bf16.mxu0 0
      %513 = vmatpush1.bf16.msra.mxu0 0
      %514 = vmatprep.subr.bf16.mxu0 0
      %515 = vmatpush1.bf16.msra.mxu0 0
      %516 = vmatprep.subr.bf16.mxu0 0
      %517 = vmatpush1.bf16.msra.mxu0 0
      %518 = vmatprep.subr.bf16.mxu0 0
      %519 = vmatpush1.bf16.msra.mxu0 0
      %520 = vmatprep.subr.bf16.mxu0 0
      %521 = vmatpush1.bf16.msra.mxu0 0
      %522 = vmatprep.subr.bf16.mxu0 0
      %523 = vmatpush1.bf16.msra.mxu0 0
      %524 = vmatprep.mubr.bf16.mxu0 0
      %525 = vmatmul.mubr.bf16.gmra.mrb[0].mxu0 %v481
      %v526 = vpop.f32.mrb[0].mxu0
      %v527 = vadd.f32 %v452, %v526
      %v528 = vpop.f32.mrb[0].mxu0
      %v529 = vadd.f32 %v454, %v528
      %v530 = vpop.f32.mrb[0].mxu0
      %v531 = vadd.f32 %v456, %v530
      %v532 = vpop.f32.mrb[0].mxu0
      %v533 = vadd.f32 %v458, %v532
      %534 = vmatprep.mubr.bf16.mxu0 0
      %535 = vmatmul.mubr.bf16.gmra.mrb[0].mxu0 %v484
      %v536 = vpop.f32.mrb[0].mxu0
      %v537 = vadd.f32 %v462, %v536
      %v538 = vpop.f32.mrb[0].mxu0
      %v539 = vadd.f32 %v464, %v538
      %v540 = vpop.f32.mrb[0].mxu0
      %v541 = vadd.f32 %v466, %v540
      %v542 = vpop.f32.mrb[0].mxu0
      %v543 = vadd.f32 %v468, %v542
      %544 = vdwg.mxu0
      %s545 = scalar_lea.vmem %s1, 32
      %v546 = vld [vmem:[%s545] sm:$0xf]
      %v547 = vld [vmem:[%s545 + $0x4] sm:$0xf]
      %v548 = vld [vmem:[%s545 + $0x8] sm:$0xf]
      %v549 = vld [vmem:[%s545 + $0xc] sm:$0xf]
      %550 = vrot.lane.b32.xlu0 %v365, 127
      %v551 = vpop.permute.xlu0 %550
      %552 = vrot.lane.b32.xlu0 %v366, 127
      %v553 = vpop.permute.xlu0 %552
      %vm554 = vcmp.lt.s32.totalorder %v335, 127
      %v555 = vsel %vm554, %v551, %v553
      %v556 = vsel %vm554, %v553, %v551
      %v557 = vsel %vm363, 1, 0
      %v558 = vsel %vm364, 1, 0
      %vm559 = vcmp.eq.s32.totalorder %v557, 1
      %vm560 = vcmp.eq.s32.totalorder %v558, 1
      %v561 = vsel %vm559, %v555, 0.0
      %v562 = vsel %vm560, %v556, 0.0
      %v563 = vpack.c.bf16 %v561, %v561
      %v564 = vpack.c.bf16 %v562, %v562
      %v569 = vunpack.c.l.b16 %v546
      %v570 = vunpack.c.l.b16 %v547
      %v571 = vunpack.c.l.b16 %v548
      %v572 = vunpack.c.l.b16 %v549
      %v573 = vpack.c.b16 %v570, %v569
      %v574 = vpack.c.b16 %v572, %v571
      %v576 = vsel %vm403, %v573, 0
      %v579 = vsel %vm403, %v574, 0
      %v582 = vsel %vm410, %v563, 0
      %v585 = vsel %vm410, %v564, 0
      %587 = vmatprep.subr.bf16.mxu0 %v585
      %588 = vmatpush1.bf16.msra.mxu0 %v582
      %589 = vmatprep.subr.bf16.mxu0 0
      %590 = vmatpush1.bf16.msra.mxu0 0
      %591 = vmatprep.subr.bf16.mxu0 0
      %592 = vmatpush1.bf16.msra.mxu0 0
      %593 = vmatprep.subr.bf16.mxu0 0
      %594 = vmatpush1.bf16.msra.mxu0 0
      %595 = vmatprep.subr.bf16.mxu0 0
      %596 = vmatpush1.bf16.msra.mxu0 0
      %597 = vmatprep.subr.bf16.mxu0 0
      %598 = vmatpush1.bf16.msra.mxu0 0
      %599 = vmatprep.subr.bf16.mxu0 0
      %600 = vmatpush1.bf16.msra.mxu0 0
      %601 = vmatprep.subr.bf16.mxu0 0
      %602 = vmatpush1.bf16.msra.mxu0 0
      %603 = vmatprep.subr.bf16.mxu0 0
      %604 = vmatpush1.bf16.msra.mxu0 0
      %605 = vmatprep.subr.bf16.mxu0 0
      %606 = vmatpush1.bf16.msra.mxu0 0
      %607 = vmatprep.subr.bf16.mxu0 0
      %608 = vmatpush1.bf16.msra.mxu0 0
      %609 = vmatprep.subr.bf16.mxu0 0
      %610 = vmatpush1.bf16.msra.mxu0 0
      %611 = vmatprep.subr.bf16.mxu0 0
      %612 = vmatpush1.bf16.msra.mxu0 0
      %613 = vmatprep.subr.bf16.mxu0 0
      %614 = vmatpush1.bf16.msra.mxu0 0
      %615 = vmatprep.subr.bf16.mxu0 0
      %616 = vmatpush1.bf16.msra.mxu0 0
      %617 = vmatprep.subr.bf16.mxu0 0
      %618 = vmatpush1.bf16.msra.mxu0 0
      %619 = vmatprep.mubr.bf16.mxu0 0
      %620 = vmatmul.mubr.bf16.gmra.mrb[0].mxu0 %v576
      %v621 = vpop.f32.mrb[0].mxu0
      %v622 = vadd.f32 0.0, %v621
      %v623 = vpop.f32.mrb[0].mxu0
      %v624 = vadd.f32 0.0, %v623
      %v625 = vpop.f32.mrb[0].mxu0
      %v626 = vadd.f32 0.0, %v625
      %v627 = vpop.f32.mrb[0].mxu0
      %v628 = vadd.f32 0.0, %v627
      %629 = vmatprep.mubr.bf16.mxu0 0
      %630 = vmatmul.mubr.bf16.gmra.mrb[0].mxu0 %v579
      %v631 = vpop.f32.mrb[0].mxu0
      %v632 = vadd.f32 0.0, %v631
      %v633 = vpop.f32.mrb[0].mxu0
      %v634 = vadd.f32 0.0, %v633
      %v635 = vpop.f32.mrb[0].mxu0
      %v636 = vadd.f32 0.0, %v635
      %v637 = vpop.f32.mrb[0].mxu0
      %v638 = vadd.f32 0.0, %v637
      %639 = vdwg.mxu0
      %v640 = vadd.f32 %v527, %v622
      %v641 = vadd.f32 %v529, %v624
      %v642 = vadd.f32 %v531, %v626
      %v643 = vadd.f32 %v533, %v628
      %v644 = vadd.f32 %v537, %v632
      %v645 = vadd.f32 %v539, %v634
      %v646 = vadd.f32 %v541, %v636
      %v647 = vadd.f32 %v543, %v638
      %v648 = vld [vmem:[%s2] sm:$0xff]
      %v649 = vld [vmem:[%s2 + $0x8] sm:$0xff]
      %v650 = vld [vmem:[%s2 + $0x10] sm:$0xff]
      %v651 = vld [vmem:[%s2 + $0x18] sm:$0xff]
      %653 = vset.pattern.permute.xlu0 0
      %654 = vperm.xlu0 %653, %v648
      %v655 = vpop.permute.xlu0 %654
      %658 = vset.pattern.permute.xlu0 0
      %659 = vperm.xlu0 %658, %v649
      %v660 = vpop.permute.xlu0 %659
      %663 = vset.pattern.permute.xlu0 0
      %664 = vperm.xlu0 %663, %v650
      %v665 = vpop.permute.xlu0 %664
      %668 = vset.pattern.permute.xlu0 0
      %669 = vperm.xlu0 %668, %v651
      %v670 = vpop.permute.xlu0 %669
      %v672 = vadd.f32 %v640, %v655
      %v673 = vadd.f32 %v641, %v655
      %v674 = vadd.f32 %v642, %v660
      %v675 = vadd.f32 %v643, %v660
      %v676 = vadd.f32 %v644, %v665
      %v677 = vadd.f32 %v645, %v665
      %v678 = vadd.f32 %v646, %v670
      %v679 = vadd.f32 %v647, %v670
      %v680 = vmax.f32 %v672, 0.0
      %v681 = vmax.f32 %v673, 0.0
      %v682 = vmax.f32 %v674, 0.0
      %v683 = vmax.f32 %v675, 0.0
      %v684 = vmax.f32 %v676, 0.0
      %v685 = vmax.f32 %v677, 0.0
      %v686 = vmax.f32 %v678, 0.0
      %v687 = vmax.f32 %v679, 0.0
      %s688 = scalar_lea.vmem %s3, 4
      %v689 = vld [vmem:[%s688] sm:$0xf]
      %v690 = vpack.c.bf16 %v682, %v680
      %v691 = vpack.c.bf16 %v683, %v681
      %v692 = vpack.c.bf16 %v686, %v684
      %v693 = vpack.c.bf16 %v687, %v685
      %v694 = vld [vmem:[%s3] sm:$0xf]
      %695 = vrot.lane.b32.xlu0 %v680, 1
      %v696 = vpop.permute.xlu0 %695
      %697 = vrot.lane.b32.xlu0 %v682, 1
      %v698 = vpop.permute.xlu0 %697
      %699 = vrot.lane.b32.xlu0 %v684, 1
      %v700 = vpop.permute.xlu0 %699
      %701 = vrot.lane.b32.xlu0 %v686, 1
      %v702 = vpop.permute.xlu0 %701
      %703 = vrot.lane.b32.xlu0 %v681, 1
      %v704 = vpop.permute.xlu0 %703
      %705 = vrot.lane.b32.xlu0 %v683, 1
      %v706 = vpop.permute.xlu0 %705
      %707 = vrot.lane.b32.xlu0 %v685, 1
      %v708 = vpop.permute.xlu0 %707
      %709 = vrot.lane.b32.xlu0 %v687, 1
      %v710 = vpop.permute.xlu0 %709
      %v711 = vsel %vm382, %v696, %v704
      %v712 = vsel %vm382, %v698, %v706
      %v713 = vsel %vm382, %v700, %v708
      %v714 = vsel %vm382, %v702, %v710
      %v715 = vsel %vm382, %v704, %v696
      %v716 = vsel %vm382, %v706, %v698
      %v717 = vsel %vm382, %v708, %v700
      %v718 = vsel %vm382, %v710, %v702
      %v719 = vsel %vm387, %v715, 0.0
      %v720 = vsel %vm388, %v711, 0.0
      %v721 = vsel %vm387, %v716, 0.0
      %v722 = vsel %vm388, %v712, 0.0
      %v723 = vsel %vm387, %v717, 0.0
      %v724 = vsel %vm388, %v713, 0.0
      %v725 = vsel %vm387, %v718, 0.0
      %v726 = vsel %vm388, %v714, 0.0
      %v727 = vpack.c.bf16 %v721, %v719
      %v728 = vpack.c.bf16 %v722, %v720
      %v729 = vpack.c.bf16 %v725, %v723
      %v730 = vpack.c.bf16 %v726, %v724
      %vm731 = vcmask 261120
      %v733 = vsel %vm731, %v694, 0
      %735 = vmatprep.subr.bf16.mxu0 %v728
      %736 = vmatpush1.bf16.msra.mxu0 %v727
      %737 = vmatprep.subr.bf16.mxu0 %v730
      %738 = vmatpush1.bf16.msra.mxu0 %v729
      %739 = vmatprep.subr.bf16.mxu0 0
      %740 = vmatpush1.bf16.msra.mxu0 0
      %741 = vmatprep.subr.bf16.mxu0 0
      %742 = vmatpush1.bf16.msra.mxu0 0
      %743 = vmatprep.subr.bf16.mxu0 0
      %744 = vmatpush1.bf16.msra.mxu0 0
      %745 = vmatprep.subr.bf16.mxu0 0
      %746 = vmatpush1.bf16.msra.mxu0 0
      %747 = vmatprep.subr.bf16.mxu0 0
      %748 = vmatpush1.bf16.msra.mxu0 0
      %749 = vmatprep.subr.bf16.mxu0 0
      %750 = vmatpush1.bf16.msra.mxu0 0
      %751 = vmatprep.subr.bf16.mxu0 0
      %752 = vmatpush1.bf16.msra.mxu0 0
      %753 = vmatprep.subr.bf16.mxu0 0
      %754 = vmatpush1.bf16.msra.mxu0 0
      %755 = vmatprep.subr.bf16.mxu0 0
      %756 = vmatpush1.bf16.msra.mxu0 0
      %757 = vmatprep.subr.bf16.mxu0 0
      %758 = vmatpush1.bf16.msra.mxu0 0
      %759 = vmatprep.subr.bf16.mxu0 0
      %760 = vmatpush1.bf16.msra.mxu0 0
      %761 = vmatprep.subr.bf16.mxu0 0
      %762 = vmatpush1.bf16.msra.mxu0 0
      %763 = vmatprep.subr.bf16.mxu0 0
      %764 = vmatpush1.bf16.msra.mxu0 0
      %765 = vmatprep.subr.bf16.mxu0 0
      %766 = vmatpush1.bf16.msra.mxu0 0
      %767 = vmatprep.mubr.bf16.mxu0 0
      %768 = vmatmul.mubr.bf16.gmra.mrb[0].mxu0 %v733
      %v769 = vpop.f32.mrb[0].mxu0
      %v770 = vadd.f32 0.0, %v769
      %v771 = vpop.f32.mrb[0].mxu0
      %v772 = vadd.f32 0.0, %v771
      %v773 = vpop.f32.mrb[0].mxu0
      %v774 = vpop.f32.mrb[0].mxu0
      %775 = vdwg.mxu0
      %v777 = vsel %vm731, %v689, 0
      %779 = vmatprep.subr.bf16.mxu0 %v691
      %780 = vmatpush1.bf16.msra.mxu0 %v690
      %781 = vmatprep.subr.bf16.mxu0 %v693
      %782 = vmatpush1.bf16.msra.mxu0 %v692
      %783 = vmatprep.subr.bf16.mxu0 0
      %784 = vmatpush1.bf16.msra.mxu0 0
      %785 = vmatprep.subr.bf16.mxu0 0
      %786 = vmatpush1.bf16.msra.mxu0 0
      %787 = vmatprep.subr.bf16.mxu0 0
      %788 = vmatpush1.bf16.msra.mxu0 0
      %789 = vmatprep.subr.bf16.mxu0 0
      %790 = vmatpush1.bf16.msra.mxu0 0
      %791 = vmatprep.subr.bf16.mxu0 0
      %792 = vmatpush1.bf16.msra.mxu0 0
      %793 = vmatprep.subr.bf16.mxu0 0
      %794 = vmatpush1.bf16.msra.mxu0 0
      %795 = vmatprep.subr.bf16.mxu0 0
      %796 = vmatpush1.bf16.msra.mxu0 0
      %797 = vmatprep.subr.bf16.mxu0 0
      %798 = vmatpush1.bf16.msra.mxu0 0
      %799 = vmatprep.subr.bf16.mxu0 0
      %800 = vmatpush1.bf16.msra.mxu0 0
      %801 = vmatprep.subr.bf16.mxu0 0
      %802 = vmatpush1.bf16.msra.mxu0 0
      %803 = vmatprep.subr.bf16.mxu0 0
      %804 = vmatpush1.bf16.msra.mxu0 0
      %805 = vmatprep.subr.bf16.mxu0 0
      %806 = vmatpush1.bf16.msra.mxu0 0
      %807 = vmatprep.subr.bf16.mxu0 0
      %808 = vmatpush1.bf16.msra.mxu0 0
      %809 = vmatprep.subr.bf16.mxu0 0
      %810 = vmatpush1.bf16.msra.mxu0 0
      %811 = vmatprep.mubr.bf16.mxu0 0
      %812 = vmatmul.mubr.bf16.gmra.mrb[0].mxu0 %v777
      %v813 = vpop.f32.mrb[0].mxu0
      %v814 = vadd.f32 %v770, %v813
      %v815 = vpop.f32.mrb[0].mxu0
      %v816 = vadd.f32 %v772, %v815
      %v817 = vpop.f32.mrb[0].mxu0
      %v818 = vpop.f32.mrb[0].mxu0
      %819 = vdwg.mxu0
      %s820 = scalar_lea.vmem %s3, 8
      %v821 = vld [vmem:[%s820] sm:$0xf]
      %822 = vrot.lane.b32.xlu0 %v680, 127
      %v823 = vpop.permute.xlu0 %822
      %824 = vrot.lane.b32.xlu0 %v682, 127
      %v825 = vpop.permute.xlu0 %824
      %826 = vrot.lane.b32.xlu0 %v684, 127
      %v827 = vpop.permute.xlu0 %826
      %828 = vrot.lane.b32.xlu0 %v686, 127
      %v829 = vpop.permute.xlu0 %828
      %830 = vrot.lane.b32.xlu0 %v681, 127
      %v831 = vpop.permute.xlu0 %830
      %832 = vrot.lane.b32.xlu0 %v683, 127
      %v833 = vpop.permute.xlu0 %832
      %834 = vrot.lane.b32.xlu0 %v685, 127
      %v835 = vpop.permute.xlu0 %834
      %836 = vrot.lane.b32.xlu0 %v687, 127
      %v837 = vpop.permute.xlu0 %836
      %v838 = vsel %vm554, %v823, %v831
      %v839 = vsel %vm554, %v825, %v833
      %v840 = vsel %vm554, %v827, %v835
      %v841 = vsel %vm554, %v829, %v837
      %v842 = vsel %vm554, %v831, %v823
      %v843 = vsel %vm554, %v833, %v825
      %v844 = vsel %vm554, %v835, %v827
      %v845 = vsel %vm554, %v837, %v829
      %v846 = vsel %vm559, %v838, 0.0
      %v847 = vsel %vm560, %v842, 0.0
      %v848 = vsel %vm559, %v839, 0.0
      %v849 = vsel %vm560, %v843, 0.0
      %v850 = vsel %vm559, %v840, 0.0
      %v851 = vsel %vm560, %v844, 0.0
      %v852 = vsel %vm559, %v841, 0.0
      %v853 = vsel %vm560, %v845, 0.0
      %v854 = vpack.c.bf16 %v848, %v846
      %v855 = vpack.c.bf16 %v849, %v847
      %v856 = vpack.c.bf16 %v852, %v850
      %v857 = vpack.c.bf16 %v853, %v851
      %v859 = vsel %vm731, %v821, 0
      %861 = vmatprep.subr.bf16.mxu0 %v855
      %862 = vmatpush1.bf16.msra.mxu0 %v854
      %863 = vmatprep.subr.bf16.mxu0 %v857
      %864 = vmatpush1.bf16.msra.mxu0 %v856
      %865 = vmatprep.subr.bf16.mxu0 0
      %866 = vmatpush1.bf16.msra.mxu0 0
      %867 = vmatprep.subr.bf16.mxu0 0
      %868 = vmatpush1.bf16.msra.mxu0 0
      %869 = vmatprep.subr.bf16.mxu0 0
      %870 = vmatpush1.bf16.msra.mxu0 0
      %871 = vmatprep.subr.bf16.mxu0 0
      %872 = vmatpush1.bf16.msra.mxu0 0
      %873 = vmatprep.subr.bf16.mxu0 0
      %874 = vmatpush1.bf16.msra.mxu0 0
      %875 = vmatprep.subr.bf16.mxu0 0
      %876 = vmatpush1.bf16.msra.mxu0 0
      %877 = vmatprep.subr.bf16.mxu0 0
      %878 = vmatpush1.bf16.msra.mxu0 0
      %879 = vmatprep.subr.bf16.mxu0 0
      %880 = vmatpush1.bf16.msra.mxu0 0
      %881 = vmatprep.subr.bf16.mxu0 0
      %882 = vmatpush1.bf16.msra.mxu0 0
      %883 = vmatprep.subr.bf16.mxu0 0
      %884 = vmatpush1.bf16.msra.mxu0 0
      %885 = vmatprep.subr.bf16.mxu0 0
      %886 = vmatpush1.bf16.msra.mxu0 0
      %887 = vmatprep.subr.bf16.mxu0 0
      %888 = vmatpush1.bf16.msra.mxu0 0
      %889 = vmatprep.subr.bf16.mxu0 0
      %890 = vmatpush1.bf16.msra.mxu0 0
      %891 = vmatprep.subr.bf16.mxu0 0
      %892 = vmatpush1.bf16.msra.mxu0 0
      %893 = vmatprep.mubr.bf16.mxu0 0
      %894 = vmatmul.mubr.bf16.gmra.mrb[0].mxu0 %v859
      %v895 = vpop.f32.mrb[0].mxu0
      %v896 = vadd.f32 0.0, %v895
      %v897 = vpop.f32.mrb[0].mxu0
      %v898 = vadd.f32 0.0, %v897
      %v899 = vpop.f32.mrb[0].mxu0
      %v900 = vpop.f32.mrb[0].mxu0
      %901 = vdwg.mxu0
      %v902 = vadd.f32 %v814, %v896
      %v903 = vadd.f32 %v816, %v898
      %v904 = vmax.f32 %v902, 0.0
      %v905 = vmax.f32 %v903, 0.0
      %v906 = vld [vmem:[%s4] sm:$0xf]
      %v907 = vld [vmem:[%s4 + $0x4] sm:$0xf]
      %v908 = vld [vmem:[%s4 + $0x8] sm:$0xf]
      %v909 = vld [vmem:[%s4 + $0xc] sm:$0xf]
      %v910 = vpack.c.bf16 %v904, %v904
      %v911 = vpack.c.bf16 %v905, %v905
      %v916 = vunpack.c.l.b16 %v906
      %v917 = vunpack.c.l.b16 %v907
      %v918 = vunpack.c.l.b16 %v908
      %v919 = vunpack.c.l.b16 %v909
      %v920 = vpack.c.b16 %v917, %v916
      %v921 = vpack.c.b16 %v919, %v918
      %v923 = vsel %vm403, %v920, 0
      %v926 = vsel %vm403, %v921, 0
      %v929 = vsel %vm410, %v910, 0
      %v932 = vsel %vm410, %v911, 0
      %934 = vmatprep.subr.bf16.mxu0 %v932
      %935 = vmatpush1.bf16.msra.mxu0 %v929
      %936 = vmatprep.subr.bf16.mxu0 0
      %937 = vmatpush1.bf16.msra.mxu0 0
      %938 = vmatprep.subr.bf16.mxu0 0
      %939 = vmatpush1.bf16.msra.mxu0 0
      %940 = vmatprep.subr.bf16.mxu0 0
      %941 = vmatpush1.bf16.msra.mxu0 0
      %942 = vmatprep.subr.bf16.mxu0 0
      %943 = vmatpush1.bf16.msra.mxu0 0
      %944 = vmatprep.subr.bf16.mxu0 0
      %945 = vmatpush1.bf16.msra.mxu0 0
      %946 = vmatprep.subr.bf16.mxu0 0
      %947 = vmatpush1.bf16.msra.mxu0 0
      %948 = vmatprep.subr.bf16.mxu0 0
      %949 = vmatpush1.bf16.msra.mxu0 0
      %950 = vmatprep.subr.bf16.mxu0 0
      %951 = vmatpush1.bf16.msra.mxu0 0
      %952 = vmatprep.subr.bf16.mxu0 0
      %953 = vmatpush1.bf16.msra.mxu0 0
      %954 = vmatprep.subr.bf16.mxu0 0
      %955 = vmatpush1.bf16.msra.mxu0 0
      %956 = vmatprep.subr.bf16.mxu0 0
      %957 = vmatpush1.bf16.msra.mxu0 0
      %958 = vmatprep.subr.bf16.mxu0 0
      %959 = vmatpush1.bf16.msra.mxu0 0
      %960 = vmatprep.subr.bf16.mxu0 0
      %961 = vmatpush1.bf16.msra.mxu0 0
      %962 = vmatprep.subr.bf16.mxu0 0
      %963 = vmatpush1.bf16.msra.mxu0 0
      %964 = vmatprep.subr.bf16.mxu0 0
      %965 = vmatpush1.bf16.msra.mxu0 0
      %966 = vmatprep.mubr.bf16.mxu0 0
      %967 = vmatmul.mubr.bf16.gmra.mrb[0].mxu0 %v923
      %v968 = vpop.f32.mrb[0].mxu0
      %v969 = vadd.f32 0.0, %v968
      %v970 = vpop.f32.mrb[0].mxu0
      %v971 = vadd.f32 0.0, %v970
      %v972 = vpop.f32.mrb[0].mxu0
      %v973 = vadd.f32 0.0, %v972
      %v974 = vpop.f32.mrb[0].mxu0
      %v975 = vadd.f32 0.0, %v974
      %976 = vmatprep.mubr.bf16.mxu0 0
      %977 = vmatmul.mubr.bf16.gmra.mrb[0].mxu0 %v926
      %v978 = vpop.f32.mrb[0].mxu0
      %v979 = vadd.f32 0.0, %v978
      %v980 = vpop.f32.mrb[0].mxu0
      %v981 = vadd.f32 0.0, %v980
      %v982 = vpop.f32.mrb[0].mxu0
      %v983 = vadd.f32 0.0, %v982
      %v984 = vpop.f32.mrb[0].mxu0
      %v985 = vadd.f32 0.0, %v984
      %986 = vdwg.mxu0
      %v987 = vadd.f32 %v672, %v969
      %v988 = vadd.f32 %v673, %v971
      %v989 = vadd.f32 %v674, %v973
      %v990 = vadd.f32 %v675, %v975
      %v991 = vadd.f32 %v676, %v979
      %v992 = vadd.f32 %v677, %v981
      %v993 = vadd.f32 %v678, %v983
      %v994 = vadd.f32 %v679, %v985
      %v995 = vmax.f32 %v987, 0.0
      %v996 = vmax.f32 %v988, 0.0
      %v997 = vmax.f32 %v989, 0.0
      %v998 = vmax.f32 %v990, 0.0
      %v999 = vmax.f32 %v991, 0.0
      %v1000 = vmax.f32 %v992, 0.0
      %v1001 = vmax.f32 %v993, 0.0
      %v1002 = vmax.f32 %v994, 0.0
      %s1003 = scalar_lea.vmem %s3, 16
      %v1004 = vld [vmem:[%s1003] sm:$0xf]
      %v1005 = vpack.c.bf16 %v997, %v995
      %v1006 = vpack.c.bf16 %v998, %v996
      %v1007 = vpack.c.bf16 %v1001, %v999
      %v1008 = vpack.c.bf16 %v1002, %v1000
      %s1009 = scalar_lea.vmem %s3, 12
      %v1010 = vld [vmem:[%s1009] sm:$0xf]
      %1011 = vrot.lane.b32.xlu0 %v995, 1
      %v1012 = vpop.permute.xlu0 %1011
      %1013 = vrot.lane.b32.xlu0 %v997, 1
      %v1014 = vpop.permute.xlu0 %1013
      %1015 = vrot.lane.b32.xlu0 %v999, 1
      %v1016 = vpop.permute.xlu0 %1015
      %1017 = vrot.lane.b32.xlu0 %v1001, 1
      %v1018 = vpop.permute.xlu0 %1017
      %1019 = vrot.lane.b32.xlu0 %v996, 1
      %v1020 = vpop.permute.xlu0 %1019
      %1021 = vrot.lane.b32.xlu0 %v998, 1
      %v1022 = vpop.permute.xlu0 %1021
      %1023 = vrot.lane.b32.xlu0 %v1000, 1
      %v1024 = vpop.permute.xlu0 %1023
      %1025 = vrot.lane.b32.xlu0 %v1002, 1
      %v1026 = vpop.permute.xlu0 %1025
      %v1027 = vsel %vm382, %v1012, %v1020
      %v1028 = vsel %vm382, %v1014, %v1022
      %v1029 = vsel %vm382, %v1016, %v1024
      %v1030 = vsel %vm382, %v1018, %v1026
      %v1031 = vsel %vm382, %v1020, %v1012
      %v1032 = vsel %vm382, %v1022, %v1014
      %v1033 = vsel %vm382, %v1024, %v1016
      %v1034 = vsel %vm382, %v1026, %v1018
      %v1035 = vsel %vm387, %v1031, 0.0
      %v1036 = vsel %vm388, %v1027, 0.0
      %v1037 = vsel %vm387, %v1032, 0.0
      %v1038 = vsel %vm388, %v1028, 0.0
      %v1039 = vsel %vm387, %v1033, 0.0
      %v1040 = vsel %vm388, %v1029, 0.0
      %v1041 = vsel %vm387, %v1034, 0.0
      %v1042 = vsel %vm388, %v1030, 0.0
      %v1043 = vpack.c.bf16 %v1037, %v1035
      %v1044 = vpack.c.bf16 %v1038, %v1036
      %v1045 = vpack.c.bf16 %v1041, %v1039
      %v1046 = vpack.c.bf16 %v1042, %v1040
      %v1048 = vsel %vm731, %v1010, 0
      %1050 = vmatprep.subr.bf16.mxu0 %v1044
      %1051 = vmatpush1.bf16.msra.mxu0 %v1043
      %1052 = vmatprep.subr.bf16.mxu0 %v1046
      %1053 = vmatpush1.bf16.msra.mxu0 %v1045
      %1054 = vmatprep.subr.bf16.mxu0 0
      %1055 = vmatpush1.bf16.msra.mxu0 0
      %1056 = vmatprep.subr.bf16.mxu0 0
      %1057 = vmatpush1.bf16.msra.mxu0 0
      %1058 = vmatprep.subr.bf16.mxu0 0
      %1059 = vmatpush1.bf16.msra.mxu0 0
      %1060 = vmatprep.subr.bf16.mxu0 0
      %1061 = vmatpush1.bf16.msra.mxu0 0
      %1062 = vmatprep.subr.bf16.mxu0 0
      %1063 = vmatpush1.bf16.msra.mxu0 0
      %1064 = vmatprep.subr.bf16.mxu0 0
      %1065 = vmatpush1.bf16.msra.mxu0 0
      %1066 = vmatprep.subr.bf16.mxu0 0
      %1067 = vmatpush1.bf16.msra.mxu0 0
      %1068 = vmatprep.subr.bf16.mxu0 0
      %1069 = vmatpush1.bf16.msra.mxu0 0
      %1070 = vmatprep.subr.bf16.mxu0 0
      %1071 = vmatpush1.bf16.msra.mxu0 0
      %1072 = vmatprep.subr.bf16.mxu0 0
      %1073 = vmatpush1.bf16.msra.mxu0 0
      %1074 = vmatprep.subr.bf16.mxu0 0
      %1075 = vmatpush1.bf16.msra.mxu0 0
      %1076 = vmatprep.subr.bf16.mxu0 0
      %1077 = vmatpush1.bf16.msra.mxu0 0
      %1078 = vmatprep.subr.bf16.mxu0 0
      %1079 = vmatpush1.bf16.msra.mxu0 0
      %1080 = vmatprep.subr.bf16.mxu0 0
      %1081 = vmatpush1.bf16.msra.mxu0 0
      %1082 = vmatprep.mubr.bf16.mxu0 0
      %1083 = vmatmul.mubr.bf16.gmra.mrb[0].mxu0 %v1048
      %v1084 = vpop.f32.mrb[0].mxu0
      %v1085 = vadd.f32 0.0, %v1084
      %v1086 = vpop.f32.mrb[0].mxu0
      %v1087 = vadd.f32 0.0, %v1086
      %v1088 = vpop.f32.mrb[0].mxu0
      %v1089 = vpop.f32.mrb[0].mxu0
      %1090 = vdwg.mxu0
      %v1092 = vsel %vm731, %v1004, 0
      %1094 = vmatprep.subr.bf16.mxu0 %v1006
      %1095 = vmatpush1.bf16.msra.mxu0 %v1005
      %1096 = vmatprep.subr.bf16.mxu0 %v1008
      %1097 = vmatpush1.bf16.msra.mxu0 %v1007
      %1098 = vmatprep.subr.bf16.mxu0 0
      %1099 = vmatpush1.bf16.msra.mxu0 0
      %1100 = vmatprep.subr.bf16.mxu0 0
      %1101 = vmatpush1.bf16.msra.mxu0 0
      %1102 = vmatprep.subr.bf16.mxu0 0
      %1103 = vmatpush1.bf16.msra.mxu0 0
      %1104 = vmatprep.subr.bf16.mxu0 0
      %1105 = vmatpush1.bf16.msra.mxu0 0
      %1106 = vmatprep.subr.bf16.mxu0 0
      %1107 = vmatpush1.bf16.msra.mxu0 0
      %1108 = vmatprep.subr.bf16.mxu0 0
      %1109 = vmatpush1.bf16.msra.mxu0 0
      %1110 = vmatprep.subr.bf16.mxu0 0
      %1111 = vmatpush1.bf16.msra.mxu0 0
      %1112 = vmatprep.subr.bf16.mxu0 0
      %1113 = vmatpush1.bf16.msra.mxu0 0
      %1114 = vmatprep.subr.bf16.mxu0 0
      %1115 = vmatpush1.bf16.msra.mxu0 0
      %1116 = vmatprep.subr.bf16.mxu0 0
      %1117 = vmatpush1.bf16.msra.mxu0 0
      %1118 = vmatprep.subr.bf16.mxu0 0
      %1119 = vmatpush1.bf16.msra.mxu0 0
      %1120 = vmatprep.subr.bf16.mxu0 0
      %1121 = vmatpush1.bf16.msra.mxu0 0
      %1122 = vmatprep.subr.bf16.mxu0 0
      %1123 = vmatpush1.bf16.msra.mxu0 0
      %1124 = vmatprep.subr.bf16.mxu0 0
      %1125 = vmatpush1.bf16.msra.mxu0 0
      %1126 = vmatprep.mubr.bf16.mxu0 0
      %1127 = vmatmul.mubr.bf16.gmra.mrb[0].mxu0 %v1092
      %v1128 = vpop.f32.mrb[0].mxu0
      %v1129 = vadd.f32 %v1085, %v1128
      %v1130 = vpop.f32.mrb[0].mxu0
      %v1131 = vadd.f32 %v1087, %v1130
      %v1132 = vpop.f32.mrb[0].mxu0
      %v1133 = vpop.f32.mrb[0].mxu0
      %1134 = vdwg.mxu0
      %s1135 = scalar_lea.vmem %s3, 20
      %v1136 = vld [vmem:[%s1135] sm:$0xf]
      %1137 = vrot.lane.b32.xlu0 %v995, 127
      %v1138 = vpop.permute.xlu0 %1137
      %1139 = vrot.lane.b32.xlu0 %v997, 127
      %v1140 = vpop.permute.xlu0 %1139
      %1141 = vrot.lane.b32.xlu0 %v999, 127
      %v1142 = vpop.permute.xlu0 %1141
      %1143 = vrot.lane.b32.xlu0 %v1001, 127
      %v1144 = vpop.permute.xlu0 %1143
      %1145 = vrot.lane.b32.xlu0 %v996, 127
      %v1146 = vpop.permute.xlu0 %1145
      %1147 = vrot.lane.b32.xlu0 %v998, 127
      %v1148 = vpop.permute.xlu0 %1147
      %1149 = vrot.lane.b32.xlu0 %v1000, 127
      %v1150 = vpop.permute.xlu0 %1149
      %1151 = vrot.lane.b32.xlu0 %v1002, 127
      %v1152 = vpop.permute.xlu0 %1151
      %v1153 = vsel %vm554, %v1138, %v1146
      %v1154 = vsel %vm554, %v1140, %v1148
      %v1155 = vsel %vm554, %v1142, %v1150
      %v1156 = vsel %vm554, %v1144, %v1152
      %v1157 = vsel %vm554, %v1146, %v1138
      %v1158 = vsel %vm554, %v1148, %v1140
      %v1159 = vsel %vm554, %v1150, %v1142
      %v1160 = vsel %vm554, %v1152, %v1144
      %v1161 = vsel %vm559, %v1153, 0.0
      %v1162 = vsel %vm560, %v1157, 0.0
      %v1163 = vsel %vm559, %v1154, 0.0
      %v1164 = vsel %vm560, %v1158, 0.0
      %v1165 = vsel %vm559, %v1155, 0.0
      %v1166 = vsel %vm560, %v1159, 0.0
      %v1167 = vsel %vm559, %v1156, 0.0
      %v1168 = vsel %vm560, %v1160, 0.0
      %v1169 = vpack.c.bf16 %v1163, %v1161
      %v1170 = vpack.c.bf16 %v1164, %v1162
      %v1171 = vpack.c.bf16 %v1167, %v1165
      %v1172 = vpack.c.bf16 %v1168, %v1166
      %v1174 = vsel %vm731, %v1136, 0
      %1176 = vmatprep.subr.bf16.mxu0 %v1170
      %1177 = vmatpush1.bf16.msra.mxu0 %v1169
      %1178 = vmatprep.subr.bf16.mxu0 %v1172
      %1179 = vmatpush1.bf16.msra.mxu0 %v1171
      %1180 = vmatprep.subr.bf16.mxu0 0
      %1181 = vmatpush1.bf16.msra.mxu0 0
      %1182 = vmatprep.subr.bf16.mxu0 0
      %1183 = vmatpush1.bf16.msra.mxu0 0
      %1184 = vmatprep.subr.bf16.mxu0 0
      %1185 = vmatpush1.bf16.msra.mxu0 0
      %1186 = vmatprep.subr.bf16.mxu0 0
      %1187 = vmatpush1.bf16.msra.mxu0 0
      %1188 = vmatprep.subr.bf16.mxu0 0
      %1189 = vmatpush1.bf16.msra.mxu0 0
      %1190 = vmatprep.subr.bf16.mxu0 0
      %1191 = vmatpush1.bf16.msra.mxu0 0
      %1192 = vmatprep.subr.bf16.mxu0 0
      %1193 = vmatpush1.bf16.msra.mxu0 0
      %1194 = vmatprep.subr.bf16.mxu0 0
      %1195 = vmatpush1.bf16.msra.mxu0 0
      %1196 = vmatprep.subr.bf16.mxu0 0
      %1197 = vmatpush1.bf16.msra.mxu0 0
      %1198 = vmatprep.subr.bf16.mxu0 0
      %1199 = vmatpush1.bf16.msra.mxu0 0
      %1200 = vmatprep.subr.bf16.mxu0 0
      %1201 = vmatpush1.bf16.msra.mxu0 0
      %1202 = vmatprep.subr.bf16.mxu0 0
      %1203 = vmatpush1.bf16.msra.mxu0 0
      %1204 = vmatprep.subr.bf16.mxu0 0
      %1205 = vmatpush1.bf16.msra.mxu0 0
      %1206 = vmatprep.subr.bf16.mxu0 0
      %1207 = vmatpush1.bf16.msra.mxu0 0
      %1208 = vmatprep.mubr.bf16.mxu0 0
      %1209 = vmatmul.mubr.bf16.gmra.mrb[0].mxu0 %v1174
      %v1210 = vpop.f32.mrb[0].mxu0
      %v1211 = vadd.f32 0.0, %v1210
      %v1212 = vpop.f32.mrb[0].mxu0
      %v1213 = vadd.f32 0.0, %v1212
      %v1214 = vpop.f32.mrb[0].mxu0
      %v1215 = vpop.f32.mrb[0].mxu0
      %1216 = vdwg.mxu0
      %v1217 = vadd.f32 %v1129, %v1211
      %v1218 = vadd.f32 %v1131, %v1213
      %v1219 = vmax.f32 %v1217, 0.0
      %v1220 = vmax.f32 %v1218, 0.0
      %s1221 = scalar_lea.vmem %s4, 16
      %v1222 = vld [vmem:[%s1221] sm:$0xf]
      %v1223 = vld [vmem:[%s1221 + $0x4] sm:$0xf]
      %v1224 = vld [vmem:[%s1221 + $0x8] sm:$0xf]
      %v1225 = vld [vmem:[%s1221 + $0xc] sm:$0xf]
      %v1226 = vpack.c.bf16 %v1219, %v1219
      %v1227 = vpack.c.bf16 %v1220, %v1220
      %v1232 = vunpack.c.l.b16 %v1222
      %v1233 = vunpack.c.l.b16 %v1223
      %v1234 = vunpack.c.l.b16 %v1224
      %v1235 = vunpack.c.l.b16 %v1225
      %v1236 = vpack.c.b16 %v1233, %v1232
      %v1237 = vpack.c.b16 %v1235, %v1234
      %v1239 = vsel %vm403, %v1236, 0
      %v1242 = vsel %vm403, %v1237, 0
      %v1245 = vsel %vm410, %v1226, 0
      %v1248 = vsel %vm410, %v1227, 0
      %1250 = vmatprep.subr.bf16.mxu0 %v1248
      %1251 = vmatpush1.bf16.msra.mxu0 %v1245
      %1252 = vmatprep.subr.bf16.mxu0 0
      %1253 = vmatpush1.bf16.msra.mxu0 0
      %1254 = vmatprep.subr.bf16.mxu0 0
      %1255 = vmatpush1.bf16.msra.mxu0 0
      %1256 = vmatprep.subr.bf16.mxu0 0
      %1257 = vmatpush1.bf16.msra.mxu0 0
      %1258 = vmatprep.subr.bf16.mxu0 0
      %1259 = vmatpush1.bf16.msra.mxu0 0
      %1260 = vmatprep.subr.bf16.mxu0 0
      %1261 = vmatpush1.bf16.msra.mxu0 0
      %1262 = vmatprep.subr.bf16.mxu0 0
      %1263 = vmatpush1.bf16.msra.mxu0 0
      %1264 = vmatprep.subr.bf16.mxu0 0
      %1265 = vmatpush1.bf16.msra.mxu0 0
      %1266 = vmatprep.subr.bf16.mxu0 0
      %1267 = vmatpush1.bf16.msra.mxu0 0
      %1268 = vmatprep.subr.bf16.mxu0 0
      %1269 = vmatpush1.bf16.msra.mxu0 0
      %1270 = vmatprep.subr.bf16.mxu0 0
      %1271 = vmatpush1.bf16.msra.mxu0 0
      %1272 = vmatprep.subr.bf16.mxu0 0
      %1273 = vmatpush1.bf16.msra.mxu0 0
      %1274 = vmatprep.subr.bf16.mxu0 0
      %1275 = vmatpush1.bf16.msra.mxu0 0
      %1276 = vmatprep.subr.bf16.mxu0 0
      %1277 = vmatpush1.bf16.msra.mxu0 0
      %1278 = vmatprep.subr.bf16.mxu0 0
      %1279 = vmatpush1.bf16.msra.mxu0 0
      %1280 = vmatprep.subr.bf16.mxu0 0
      %1281 = vmatpush1.bf16.msra.mxu0 0
      %1282 = vmatprep.mubr.bf16.mxu0 0
      %1283 = vmatmul.mubr.bf16.gmra.mrb[0].mxu0 %v1239
      %v1284 = vpop.f32.mrb[0].mxu0
      %v1285 = vadd.f32 0.0, %v1284
      %v1286 = vpop.f32.mrb[0].mxu0
      %v1287 = vadd.f32 0.0, %v1286
      %v1288 = vpop.f32.mrb[0].mxu0
      %v1289 = vadd.f32 0.0, %v1288
      %v1290 = vpop.f32.mrb[0].mxu0
      %v1291 = vadd.f32 0.0, %v1290
      %1292 = vmatprep.mubr.bf16.mxu0 0
      %1293 = vmatmul.mubr.bf16.gmra.mrb[0].mxu0 %v1242
      %v1294 = vpop.f32.mrb[0].mxu0
      %v1295 = vadd.f32 0.0, %v1294
      %v1296 = vpop.f32.mrb[0].mxu0
      %v1297 = vadd.f32 0.0, %v1296
      %v1298 = vpop.f32.mrb[0].mxu0
      %v1299 = vadd.f32 0.0, %v1298
      %v1300 = vpop.f32.mrb[0].mxu0
      %v1301 = vadd.f32 0.0, %v1300
      %1302 = vdwg.mxu0
      %v1303 = vadd.f32 %v987, %v1285
      %v1304 = vadd.f32 %v988, %v1287
      %v1305 = vadd.f32 %v989, %v1289
      %v1306 = vadd.f32 %v990, %v1291
      %v1307 = vadd.f32 %v991, %v1295
      %v1308 = vadd.f32 %v992, %v1297
      %v1309 = vadd.f32 %v993, %v1299
      %v1310 = vadd.f32 %v994, %v1301
      %v1311 = vmax.f32 %v1303, 0.0
      %v1312 = vmax.f32 %v1304, 0.0
      %v1313 = vmax.f32 %v1305, 0.0
      %v1314 = vmax.f32 %v1306, 0.0
      %v1315 = vmax.f32 %v1307, 0.0
      %v1316 = vmax.f32 %v1308, 0.0
      %v1317 = vmax.f32 %v1309, 0.0
      %v1318 = vmax.f32 %v1310, 0.0
      %s1319 = scalar_lea.vmem %s5, 8
      %v1320 = vld [vmem:[%s1319] sm:$0xf]
      %v1321 = vld [vmem:[%s1319 + $0x4] sm:$0xf]
      %v1322 = vpack.c.bf16 %v1313, %v1311
      %v1323 = vpack.c.bf16 %v1314, %v1312
      %v1324 = vpack.c.bf16 %v1317, %v1315
      %v1325 = vpack.c.bf16 %v1318, %v1316
      %s1326 = scalar_lea.vmem %s5, 24
      %v1327 = vld [vmem:[%s1326] sm:$0xf]
      %v1328 = vld [vmem:[%s1326 + $0x4] sm:$0xf]
      %1329 = vrot.lane.b32.xlu0 %v1311, 1
      %v1330 = vpop.permute.xlu0 %1329
      %1331 = vrot.lane.b32.xlu0 %v1313, 1
      %v1332 = vpop.permute.xlu0 %1331
      %1333 = vrot.lane.b32.xlu0 %v1315, 1
      %v1334 = vpop.permute.xlu0 %1333
      %1335 = vrot.lane.b32.xlu0 %v1317, 1
      %v1336 = vpop.permute.xlu0 %1335
      %1337 = vrot.lane.b32.xlu0 %v1312, 1
      %v1338 = vpop.permute.xlu0 %1337
      %1339 = vrot.lane.b32.xlu0 %v1314, 1
      %v1340 = vpop.permute.xlu0 %1339
      %1341 = vrot.lane.b32.xlu0 %v1316, 1
      %v1342 = vpop.permute.xlu0 %1341
      %1343 = vrot.lane.b32.xlu0 %v1318, 1
      %v1344 = vpop.permute.xlu0 %1343
      %v1345 = vsel %vm382, %v1330, %v1338
      %v1346 = vsel %vm382, %v1332, %v1340
      %v1347 = vsel %vm382, %v1334, %v1342
      %v1348 = vsel %vm382, %v1336, %v1344
      %v1349 = vsel %vm382, %v1338, %v1330
      %v1350 = vsel %vm382, %v1340, %v1332
      %v1351 = vsel %vm382, %v1342, %v1334
      %v1352 = vsel %vm382, %v1344, %v1336
      %v1353 = vsel %vm387, %v1349, 0.0
      %v1354 = vsel %vm388, %v1345, 0.0
      %v1355 = vsel %vm387, %v1350, 0.0
      %v1356 = vsel %vm388, %v1346, 0.0
      %v1357 = vsel %vm387, %v1351, 0.0
      %v1358 = vsel %vm388, %v1347, 0.0
      %v1359 = vsel %vm387, %v1352, 0.0
      %v1360 = vsel %vm388, %v1348, 0.0
      %v1361 = vpack.c.bf16 %v1355, %v1353
      %v1362 = vpack.c.bf16 %v1356, %v1354
      %v1363 = vpack.c.bf16 %v1359, %v1357
      %v1364 = vpack.c.bf16 %v1360, %v1358
      %v1367 = vunpack.c.l.b16 %v1327
      %v1368 = vunpack.c.l.b16 %v1328
      %v1369 = vpack.c.b16 %v1368, %v1367
      %v1371 = vsel %vm731, %v1369, 0
      %1373 = vmatprep.subr.bf16.mxu0 %v1362
      %1374 = vmatpush1.bf16.msra.mxu0 %v1361
      %1375 = vmatprep.subr.bf16.mxu0 %v1364
      %1376 = vmatpush1.bf16.msra.mxu0 %v1363
      %1377 = vmatprep.subr.bf16.mxu0 0
      %1378 = vmatpush1.bf16.msra.mxu0 0
      %1379 = vmatprep.subr.bf16.mxu0 0
      %1380 = vmatpush1.bf16.msra.mxu0 0
      %1381 = vmatprep.subr.bf16.mxu0 0
      %1382 = vmatpush1.bf16.msra.mxu0 0
      %1383 = vmatprep.subr.bf16.mxu0 0
      %1384 = vmatpush1.bf16.msra.mxu0 0
      %1385 = vmatprep.subr.bf16.mxu0 0
      %1386 = vmatpush1.bf16.msra.mxu0 0
      %1387 = vmatprep.subr.bf16.mxu0 0
      %1388 = vmatpush1.bf16.msra.mxu0 0
      %1389 = vmatprep.subr.bf16.mxu0 0
      %1390 = vmatpush1.bf16.msra.mxu0 0
      %1391 = vmatprep.subr.bf16.mxu0 0
      %1392 = vmatpush1.bf16.msra.mxu0 0
      %1393 = vmatprep.subr.bf16.mxu0 0
      %1394 = vmatpush1.bf16.msra.mxu0 0
      %1395 = vmatprep.subr.bf16.mxu0 0
      %1396 = vmatpush1.bf16.msra.mxu0 0
      %1397 = vmatprep.subr.bf16.mxu0 0
      %1398 = vmatpush1.bf16.msra.mxu0 0
      %1399 = vmatprep.subr.bf16.mxu0 0
      %1400 = vmatpush1.bf16.msra.mxu0 0
      %1401 = vmatprep.subr.bf16.mxu0 0
      %1402 = vmatpush1.bf16.msra.mxu0 0
      %1403 = vmatprep.subr.bf16.mxu0 0
      %1404 = vmatpush1.bf16.msra.mxu0 0
      %1405 = vmatprep.mubr.bf16.mxu0 0
      %1406 = vmatmul.mubr.bf16.gmra.mrb[0].mxu0 %v1371
      %v1407 = vpop.f32.mrb[0].mxu0
      %v1408 = vadd.f32 0.0, %v1407
      %v1409 = vpop.f32.mrb[0].mxu0
      %v1410 = vadd.f32 0.0, %v1409
      %v1411 = vpop.f32.mrb[0].mxu0
      %v1412 = vadd.f32 0.0, %v1411
      %v1413 = vpop.f32.mrb[0].mxu0
      %v1414 = vadd.f32 0.0, %v1413
      %1415 = vdwg.mxu0
      %v1418 = vunpack.c.l.b16 %v1320
      %v1419 = vunpack.c.l.b16 %v1321
      %v1420 = vpack.c.b16 %v1419, %v1418
      %v1422 = vsel %vm731, %v1420, 0
      %1424 = vmatprep.subr.bf16.mxu0 %v1323
      %1425 = vmatpush1.bf16.msra.mxu0 %v1322
      %1426 = vmatprep.subr.bf16.mxu0 %v1325
      %1427 = vmatpush1.bf16.msra.mxu0 %v1324
      %1428 = vmatprep.subr.bf16.mxu0 0
      %1429 = vmatpush1.bf16.msra.mxu0 0
      %1430 = vmatprep.subr.bf16.mxu0 0
      %1431 = vmatpush1.bf16.msra.mxu0 0
      %1432 = vmatprep.subr.bf16.mxu0 0
      %1433 = vmatpush1.bf16.msra.mxu0 0
      %1434 = vmatprep.subr.bf16.mxu0 0
      %1435 = vmatpush1.bf16.msra.mxu0 0
      %1436 = vmatprep.subr.bf16.mxu0 0
      %1437 = vmatpush1.bf16.msra.mxu0 0
      %1438 = vmatprep.subr.bf16.mxu0 0
      %1439 = vmatpush1.bf16.msra.mxu0 0
      %1440 = vmatprep.subr.bf16.mxu0 0
      %1441 = vmatpush1.bf16.msra.mxu0 0
      %1442 = vmatprep.subr.bf16.mxu0 0
      %1443 = vmatpush1.bf16.msra.mxu0 0
      %1444 = vmatprep.subr.bf16.mxu0 0
      %1445 = vmatpush1.bf16.msra.mxu0 0
      %1446 = vmatprep.subr.bf16.mxu0 0
      %1447 = vmatpush1.bf16.msra.mxu0 0
      %1448 = vmatprep.subr.bf16.mxu0 0
      %1449 = vmatpush1.bf16.msra.mxu0 0
      %1450 = vmatprep.subr.bf16.mxu0 0
      %1451 = vmatpush1.bf16.msra.mxu0 0
      %1452 = vmatprep.subr.bf16.mxu0 0
      %1453 = vmatpush1.bf16.msra.mxu0 0
      %1454 = vmatprep.subr.bf16.mxu0 0
      %1455 = vmatpush1.bf16.msra.mxu0 0
      %1456 = vmatprep.mubr.bf16.mxu0 0
      %1457 = vmatmul.mubr.bf16.gmra.mrb[0].mxu0 %v1422
      %v1458 = vpop.f32.mrb[0].mxu0
      %v1459 = vadd.f32 %v1408, %v1458
      %v1460 = vpop.f32.mrb[0].mxu0
      %v1461 = vadd.f32 %v1410, %v1460
      %v1462 = vpop.f32.mrb[0].mxu0
      %v1463 = vadd.f32 %v1412, %v1462
      %v1464 = vpop.f32.mrb[0].mxu0
      %v1465 = vadd.f32 %v1414, %v1464
      %1466 = vdwg.mxu0
      %v1467 = vld [vmem:[%s6] sm:$0xff]
      %v1468 = vld [vmem:[%s6 + $0x8] sm:$0xff]
      %1470 = vset.pattern.permute.xlu0 0
      %1471 = vperm.xlu0 %1470, %v1467
      %v1472 = vpop.permute.xlu0 %1471
      %1475 = vset.pattern.permute.xlu0 0
      %1476 = vperm.xlu0 %1475, %v1468
      %v1477 = vpop.permute.xlu0 %1476
      %v1479 = vadd.f32 %v1459, %v1472
      %v1480 = vadd.f32 %v1461, %v1472
      %v1481 = vadd.f32 %v1463, %v1477
      %v1482 = vadd.f32 %v1465, %v1477
      %v1483 = vmax.f32 %v1479, 0.0
      %v1484 = vmax.f32 %v1480, 0.0
      %v1485 = vmax.f32 %v1481, 0.0
      %v1486 = vmax.f32 %v1482, 0.0
      %s1487 = scalar_lea.vmem %s5, 16
      %v1488 = vld [vmem:[%s1487] sm:$0xf]
      %v1489 = vld [vmem:[%s1487 + $0x4] sm:$0xf]
      %v1490 = vld [vmem:[%s5] sm:$0xf]
      %v1491 = vld [vmem:[%s5 + $0x4] sm:$0xf]
      %1492 = vrot.lane.b32.xlu0 %v1311, 127
      %v1493 = vpop.permute.xlu0 %1492
      %1494 = vrot.lane.b32.xlu0 %v1313, 127
      %v1495 = vpop.permute.xlu0 %1494
      %1496 = vrot.lane.b32.xlu0 %v1315, 127
      %v1497 = vpop.permute.xlu0 %1496
      %1498 = vrot.lane.b32.xlu0 %v1317, 127
      %v1499 = vpop.permute.xlu0 %1498
      %1500 = vrot.lane.b32.xlu0 %v1312, 127
      %v1501 = vpop.permute.xlu0 %1500
      %1502 = vrot.lane.b32.xlu0 %v1314, 127
      %v1503 = vpop.permute.xlu0 %1502
      %1504 = vrot.lane.b32.xlu0 %v1316, 127
      %v1505 = vpop.permute.xlu0 %1504
      %1506 = vrot.lane.b32.xlu0 %v1318, 127
      %v1507 = vpop.permute.xlu0 %1506
      %v1508 = vsel %vm554, %v1493, %v1501
      %v1509 = vsel %vm554, %v1495, %v1503
      %v1510 = vsel %vm554, %v1497, %v1505
      %v1511 = vsel %vm554, %v1499, %v1507
      %v1512 = vsel %vm554, %v1501, %v1493
      %v1513 = vsel %vm554, %v1503, %v1495
      %v1514 = vsel %vm554, %v1505, %v1497
      %v1515 = vsel %vm554, %v1507, %v1499
      %v1516 = vsel %vm559, %v1508, 0.0
      %v1517 = vsel %vm560, %v1512, 0.0
      %v1518 = vsel %vm559, %v1509, 0.0
      %v1519 = vsel %vm560, %v1513, 0.0
      %v1520 = vsel %vm559, %v1510, 0.0
      %v1521 = vsel %vm560, %v1514, 0.0
      %v1522 = vsel %vm559, %v1511, 0.0
      %v1523 = vsel %vm560, %v1515, 0.0
      %v1524 = vpack.c.bf16 %v1518, %v1516
      %v1525 = vpack.c.bf16 %v1519, %v1517
      %v1526 = vpack.c.bf16 %v1522, %v1520
      %v1527 = vpack.c.bf16 %v1523, %v1521
      %v1530 = vunpack.c.l.b16 %v1490
      %v1531 = vunpack.c.l.b16 %v1491
      %v1532 = vpack.c.b16 %v1531, %v1530
      %v1534 = vsel %vm731, %v1532, 0
      %1536 = vmatprep.subr.bf16.mxu0 %v1525
      %1537 = vmatpush1.bf16.msra.mxu0 %v1524
      %1538 = vmatprep.subr.bf16.mxu0 %v1527
      %1539 = vmatpush1.bf16.msra.mxu0 %v1526
      %1540 = vmatprep.subr.bf16.mxu0 0
      %1541 = vmatpush1.bf16.msra.mxu0 0
      %1542 = vmatprep.subr.bf16.mxu0 0
      %1543 = vmatpush1.bf16.msra.mxu0 0
      %1544 = vmatprep.subr.bf16.mxu0 0
      %1545 = vmatpush1.bf16.msra.mxu0 0
      %1546 = vmatprep.subr.bf16.mxu0 0
      %1547 = vmatpush1.bf16.msra.mxu0 0
      %1548 = vmatprep.subr.bf16.mxu0 0
      %1549 = vmatpush1.bf16.msra.mxu0 0
      %1550 = vmatprep.subr.bf16.mxu0 0
      %1551 = vmatpush1.bf16.msra.mxu0 0
      %1552 = vmatprep.subr.bf16.mxu0 0
      %1553 = vmatpush1.bf16.msra.mxu0 0
      %1554 = vmatprep.subr.bf16.mxu0 0
      %1555 = vmatpush1.bf16.msra.mxu0 0
      %1556 = vmatprep.subr.bf16.mxu0 0
      %1557 = vmatpush1.bf16.msra.mxu0 0
      %1558 = vmatprep.subr.bf16.mxu0 0
      %1559 = vmatpush1.bf16.msra.mxu0 0
      %1560 = vmatprep.subr.bf16.mxu0 0
      %1561 = vmatpush1.bf16.msra.mxu0 0
      %1562 = vmatprep.subr.bf16.mxu0 0
      %1563 = vmatpush1.bf16.msra.mxu0 0
      %1564 = vmatprep.subr.bf16.mxu0 0
      %1565 = vmatpush1.bf16.msra.mxu0 0
      %1566 = vmatprep.subr.bf16.mxu0 0
      %1567 = vmatpush1.bf16.msra.mxu0 0
      %1568 = vmatprep.mubr.bf16.mxu0 0
      %1569 = vmatmul.mubr.bf16.gmra.mrb[0].mxu0 %v1534
      %v1570 = vpop.f32.mrb[0].mxu0
      %v1571 = vadd.f32 0.0, %v1570
      %v1572 = vpop.f32.mrb[0].mxu0
      %v1573 = vadd.f32 0.0, %v1572
      %v1574 = vpop.f32.mrb[0].mxu0
      %v1575 = vadd.f32 0.0, %v1574
      %v1576 = vpop.f32.mrb[0].mxu0
      %v1577 = vadd.f32 0.0, %v1576
      %1578 = vdwg.mxu0
      %v1581 = vunpack.c.l.b16 %v1488
      %v1582 = vunpack.c.l.b16 %v1489
      %v1583 = vpack.c.b16 %v1582, %v1581
      %v1585 = vsel %vm731, %v1583, 0
      %1587 = vmatprep.subr.bf16.mxu0 %v1323
      %1588 = vmatpush1.bf16.msra.mxu0 %v1322
      %1589 = vmatprep.subr.bf16.mxu0 %v1325
      %1590 = vmatpush1.bf16.msra.mxu0 %v1324
      %1591 = vmatprep.subr.bf16.mxu0 0
      %1592 = vmatpush1.bf16.msra.mxu0 0
      %1593 = vmatprep.subr.bf16.mxu0 0
      %1594 = vmatpush1.bf16.msra.mxu0 0
      %1595 = vmatprep.subr.bf16.mxu0 0
      %1596 = vmatpush1.bf16.msra.mxu0 0
      %1597 = vmatprep.subr.bf16.mxu0 0
      %1598 = vmatpush1.bf16.msra.mxu0 0
      %1599 = vmatprep.subr.bf16.mxu0 0
      %1600 = vmatpush1.bf16.msra.mxu0 0
      %1601 = vmatprep.subr.bf16.mxu0 0
      %1602 = vmatpush1.bf16.msra.mxu0 0
      %1603 = vmatprep.subr.bf16.mxu0 0
      %1604 = vmatpush1.bf16.msra.mxu0 0
      %1605 = vmatprep.subr.bf16.mxu0 0
      %1606 = vmatpush1.bf16.msra.mxu0 0
      %1607 = vmatprep.subr.bf16.mxu0 0
      %1608 = vmatpush1.bf16.msra.mxu0 0
      %1609 = vmatprep.subr.bf16.mxu0 0
      %1610 = vmatpush1.bf16.msra.mxu0 0
      %1611 = vmatprep.subr.bf16.mxu0 0
      %1612 = vmatpush1.bf16.msra.mxu0 0
      %1613 = vmatprep.subr.bf16.mxu0 0
      %1614 = vmatpush1.bf16.msra.mxu0 0
      %1615 = vmatprep.subr.bf16.mxu0 0
      %1616 = vmatpush1.bf16.msra.mxu0 0
      %1617 = vmatprep.subr.bf16.mxu0 0
      %1618 = vmatpush1.bf16.msra.mxu0 0
      %1619 = vmatprep.mubr.bf16.mxu0 0
      %1620 = vmatmul.mubr.bf16.gmra.mrb[0].mxu0 %v1585
      %v1621 = vpop.f32.mrb[0].mxu0
      %v1622 = vadd.f32 %v1571, %v1621
      %v1623 = vpop.f32.mrb[0].mxu0
      %v1624 = vadd.f32 %v1573, %v1623
      %v1625 = vpop.f32.mrb[0].mxu0
      %v1626 = vadd.f32 %v1575, %v1625
      %v1627 = vpop.f32.mrb[0].mxu0
      %v1628 = vadd.f32 %v1577, %v1627
      %1629 = vdwg.mxu0
      %v1630 = vadd.f32 %v1622, %v1472
      %v1631 = vadd.f32 %v1624, %v1472
      %v1632 = vadd.f32 %v1626, %v1477
      %v1633 = vadd.f32 %v1628, %v1477
      %v1634 = vmax.f32 %v1630, 0.0
      %v1635 = vmax.f32 %v1631, 0.0
      %v1636 = vmax.f32 %v1632, 0.0
      %v1637 = vmax.f32 %v1633, 0.0
      %v1638 = vld [vmem:[%s7] sm:$0xf]
      %v1639 = vld [vmem:[%s7 + $0x4] sm:$0xf]
      %v1640 = vpack.c.bf16 %v1485, %v1483
      %v1641 = vpack.c.bf16 %v1486, %v1484
      %s1642 = scalar_lea.vmem %s7, 8
      %v1643 = vld [vmem:[%s1642] sm:$0xf]
      %v1644 = vld [vmem:[%s1642 + $0x4] sm:$0xf]
      %v1645 = vpack.c.bf16 %v1636, %v1634
      %v1646 = vpack.c.bf16 %v1637, %v1635
      %v1649 = vunpack.c.l.b16 %v1643
      %v1650 = vunpack.c.l.b16 %v1644
      %v1651 = vpack.c.b16 %v1650, %v1649
      %vm1652 = vcmask 130048
      %v1654 = vsel %vm1652, %v1651, 0
      %1656 = vmatprep.subr.bf16.mxu0 %v1646
      %1657 = vmatpush1.bf16.msra.mxu0 %v1645
      %1658 = vmatprep.subr.bf16.mxu0 0
      %1659 = vmatpush1.bf16.msra.mxu0 0
      %1660 = vmatprep.subr.bf16.mxu0 0
      %1661 = vmatpush1.bf16.msra.mxu0 0
      %1662 = vmatprep.subr.bf16.mxu0 0
      %1663 = vmatpush1.bf16.msra.mxu0 0
      %1664 = vmatprep.subr.bf16.mxu0 0
      %1665 = vmatpush1.bf16.msra.mxu0 0
      %1666 = vmatprep.subr.bf16.mxu0 0
      %1667 = vmatpush1.bf16.msra.mxu0 0
      %1668 = vmatprep.subr.bf16.mxu0 0
      %1669 = vmatpush1.bf16.msra.mxu0 0
      %1670 = vmatprep.subr.bf16.mxu0 0
      %1671 = vmatpush1.bf16.msra.mxu0 0
      %1672 = vmatprep.subr.bf16.mxu0 0
      %1673 = vmatpush1.bf16.msra.mxu0 0
      %1674 = vmatprep.subr.bf16.mxu0 0
      %1675 = vmatpush1.bf16.msra.mxu0 0
      %1676 = vmatprep.subr.bf16.mxu0 0
      %1677 = vmatpush1.bf16.msra.mxu0 0
      %1678 = vmatprep.subr.bf16.mxu0 0
      %1679 = vmatpush1.bf16.msra.mxu0 0
      %1680 = vmatprep.subr.bf16.mxu0 0
      %1681 = vmatpush1.bf16.msra.mxu0 0
      %1682 = vmatprep.subr.bf16.mxu0 0
      %1683 = vmatpush1.bf16.msra.mxu0 0
      %1684 = vmatprep.subr.bf16.mxu0 0
      %1685 = vmatpush1.bf16.msra.mxu0 0
      %1686 = vmatprep.subr.bf16.mxu0 0
      %1687 = vmatpush1.bf16.msra.mxu0 0
      %1688 = vmatprep.mubr.bf16.mxu0 0
      %1689 = vmatmul.mubr.bf16.gmra.mrb[0].mxu0 %v1654
      %v1690 = vpop.f32.mrb[0].mxu0
      %v1691 = vadd.f32 0.0, %v1690
      %v1692 = vpop.f32.mrb[0].mxu0
      %v1693 = vadd.f32 0.0, %v1692
      %v1694 = vpop.f32.mrb[0].mxu0
      %v1695 = vadd.f32 0.0, %v1694
      %v1696 = vpop.f32.mrb[0].mxu0
      %v1697 = vadd.f32 0.0, %v1696
      %1698 = vdwg.mxu0
      %v1701 = vunpack.c.l.b16 %v1638
      %v1702 = vunpack.c.l.b16 %v1639
      %v1703 = vpack.c.b16 %v1702, %v1701
      %v1705 = vsel %vm1652, %v1703, 0
      %1707 = vmatprep.subr.bf16.mxu0 %v1641
      %1708 = vmatpush1.bf16.msra.mxu0 %v1640
      %1709 = vmatprep.subr.bf16.mxu0 0
      %1710 = vmatpush1.bf16.msra.mxu0 0
      %1711 = vmatprep.subr.bf16.mxu0 0
      %1712 = vmatpush1.bf16.msra.mxu0 0
      %1713 = vmatprep.subr.bf16.mxu0 0
      %1714 = vmatpush1.bf16.msra.mxu0 0
      %1715 = vmatprep.subr.bf16.mxu0 0
      %1716 = vmatpush1.bf16.msra.mxu0 0
      %1717 = vmatprep.subr.bf16.mxu0 0
      %1718 = vmatpush1.bf16.msra.mxu0 0
      %1719 = vmatprep.subr.bf16.mxu0 0
      %1720 = vmatpush1.bf16.msra.mxu0 0
      %1721 = vmatprep.subr.bf16.mxu0 0
      %1722 = vmatpush1.bf16.msra.mxu0 0
      %1723 = vmatprep.subr.bf16.mxu0 0
      %1724 = vmatpush1.bf16.msra.mxu0 0
      %1725 = vmatprep.subr.bf16.mxu0 0
      %1726 = vmatpush1.bf16.msra.mxu0 0
      %1727 = vmatprep.subr.bf16.mxu0 0
      %1728 = vmatpush1.bf16.msra.mxu0 0
      %1729 = vmatprep.subr.bf16.mxu0 0
      %1730 = vmatpush1.bf16.msra.mxu0 0
      %1731 = vmatprep.subr.bf16.mxu0 0
      %1732 = vmatpush1.bf16.msra.mxu0 0
      %1733 = vmatprep.subr.bf16.mxu0 0
      %1734 = vmatpush1.bf16.msra.mxu0 0
      %1735 = vmatprep.subr.bf16.mxu0 0
      %1736 = vmatpush1.bf16.msra.mxu0 0
      %1737 = vmatprep.subr.bf16.mxu0 0
      %1738 = vmatpush1.bf16.msra.mxu0 0
      %1739 = vmatprep.mubr.bf16.mxu0 0
      %1740 = vmatmul.mubr.bf16.gmra.mrb[0].mxu0 %v1705
      %v1741 = vpop.f32.mrb[0].mxu0
      %v1742 = vadd.f32 %v1691, %v1741
      %v1743 = vpop.f32.mrb[0].mxu0
      %v1744 = vadd.f32 %v1693, %v1743
      %v1745 = vpop.f32.mrb[0].mxu0
      %v1746 = vadd.f32 %v1695, %v1745
      %v1747 = vpop.f32.mrb[0].mxu0
      %v1748 = vadd.f32 %v1697, %v1747
      %1749 = vdwg.mxu0
      %s1750 = scalar_lea.vmem %s7, 16
      %v1751 = vld [vmem:[%s1750] sm:$0xf]
      %v1752 = vld [vmem:[%s1750 + $0x4] sm:$0xf]
      %1753 = vrot.lane.b32.xlu0 %v1634, 1
      %v1754 = vpop.permute.xlu0 %1753
      %1755 = vrot.lane.b32.xlu0 %v1636, 1
      %v1756 = vpop.permute.xlu0 %1755
      %1757 = vrot.lane.b32.xlu0 %v1635, 1
      %v1758 = vpop.permute.xlu0 %1757
      %1759 = vrot.lane.b32.xlu0 %v1637, 1
      %v1760 = vpop.permute.xlu0 %1759
      %v1761 = vsel %vm382, %v1754, %v1758
      %v1762 = vsel %vm382, %v1756, %v1760
      %v1763 = vsel %vm382, %v1758, %v1754
      %v1764 = vsel %vm382, %v1760, %v1756
      %v1765 = vsel %vm387, %v1763, 0.0
      %v1766 = vsel %vm388, %v1761, 0.0
      %v1767 = vsel %vm387, %v1764, 0.0
      %v1768 = vsel %vm388, %v1762, 0.0
      %v1769 = vpack.c.bf16 %v1767, %v1765
      %v1770 = vpack.c.bf16 %v1768, %v1766
      %v1773 = vunpack.c.l.b16 %v1751
      %v1774 = vunpack.c.l.b16 %v1752
      %v1775 = vpack.c.b16 %v1774, %v1773
      %v1777 = vsel %vm1652, %v1775, 0
      %1779 = vmatprep.subr.bf16.mxu0 %v1770
      %1780 = vmatpush1.bf16.msra.mxu0 %v1769
      %1781 = vmatprep.subr.bf16.mxu0 0
      %1782 = vmatpush1.bf16.msra.mxu0 0
      %1783 = vmatprep.subr.bf16.mxu0 0
      %1784 = vmatpush1.bf16.msra.mxu0 0
      %1785 = vmatprep.subr.bf16.mxu0 0
      %1786 = vmatpush1.bf16.msra.mxu0 0
      %1787 = vmatprep.subr.bf16.mxu0 0
      %1788 = vmatpush1.bf16.msra.mxu0 0
      %1789 = vmatprep.subr.bf16.mxu0 0
      %1790 = vmatpush1.bf16.msra.mxu0 0
      %1791 = vmatprep.subr.bf16.mxu0 0
      %1792 = vmatpush1.bf16.msra.mxu0 0
      %1793 = vmatprep.subr.bf16.mxu0 0
      %1794 = vmatpush1.bf16.msra.mxu0 0
      %1795 = vmatprep.subr.bf16.mxu0 0
      %1796 = vmatpush1.bf16.msra.mxu0 0
      %1797 = vmatprep.subr.bf16.mxu0 0
      %1798 = vmatpush1.bf16.msra.mxu0 0
      %1799 = vmatprep.subr.bf16.mxu0 0
      %1800 = vmatpush1.bf16.msra.mxu0 0
      %1801 = vmatprep.subr.bf16.mxu0 0
      %1802 = vmatpush1.bf16.msra.mxu0 0
      %1803 = vmatprep.subr.bf16.mxu0 0
      %1804 = vmatpush1.bf16.msra.mxu0 0
      %1805 = vmatprep.subr.bf16.mxu0 0
      %1806 = vmatpush1.bf16.msra.mxu0 0
      %1807 = vmatprep.subr.bf16.mxu0 0
      %1808 = vmatpush1.bf16.msra.mxu0 0
      %1809 = vmatprep.subr.bf16.mxu0 0
      %1810 = vmatpush1.bf16.msra.mxu0 0
      %1811 = vmatprep.mubr.bf16.mxu0 0
      %1812 = vmatmul.mubr.bf16.gmra.mrb[0].mxu0 %v1777
      %v1813 = vpop.f32.mrb[0].mxu0
      %v1814 = vadd.f32 0.0, %v1813
      %v1815 = vpop.f32.mrb[0].mxu0
      %v1816 = vadd.f32 0.0, %v1815
      %v1817 = vpop.f32.mrb[0].mxu0
      %v1818 = vadd.f32 0.0, %v1817
      %v1819 = vpop.f32.mrb[0].mxu0
      %v1820 = vadd.f32 0.0, %v1819
      %1821 = vdwg.mxu0
      %v1822 = vadd.f32 %v1742, %v1814
      %v1823 = vadd.f32 %v1744, %v1816
      %v1824 = vadd.f32 %v1746, %v1818
      %v1825 = vadd.f32 %v1748, %v1820
      %s1826 = scalar_lea.vmem %s7, 24
      %v1827 = vld [vmem:[%s1826] sm:$0xf]
      %v1828 = vld [vmem:[%s1826 + $0x4] sm:$0xf]
      %1829 = vrot.lane.b32.xlu0 %v1483, 127
      %v1830 = vpop.permute.xlu0 %1829
      %1831 = vrot.lane.b32.xlu0 %v1485, 127
      %v1832 = vpop.permute.xlu0 %1831
      %1833 = vrot.lane.b32.xlu0 %v1484, 127
      %v1834 = vpop.permute.xlu0 %1833
      %1835 = vrot.lane.b32.xlu0 %v1486, 127
      %v1836 = vpop.permute.xlu0 %1835
      %v1837 = vsel %vm554, %v1830, %v1834
      %v1838 = vsel %vm554, %v1832, %v1836
      %v1839 = vsel %vm554, %v1834, %v1830
      %v1840 = vsel %vm554, %v1836, %v1832
      %v1841 = vsel %vm559, %v1837, 0.0
      %v1842 = vsel %vm560, %v1839, 0.0
      %v1843 = vsel %vm559, %v1838, 0.0
      %v1844 = vsel %vm560, %v1840, 0.0
      %v1845 = vpack.c.bf16 %v1843, %v1841
      %v1846 = vpack.c.bf16 %v1844, %v1842
      %v1849 = vunpack.c.l.b16 %v1827
      %v1850 = vunpack.c.l.b16 %v1828
      %v1851 = vpack.c.b16 %v1850, %v1849
      %v1853 = vsel %vm1652, %v1851, 0
      %1855 = vmatprep.subr.bf16.mxu0 %v1846
      %1856 = vmatpush1.bf16.msra.mxu0 %v1845
      %1857 = vmatprep.subr.bf16.mxu0 0
      %1858 = vmatpush1.bf16.msra.mxu0 0
      %1859 = vmatprep.subr.bf16.mxu0 0
      %1860 = vmatpush1.bf16.msra.mxu0 0
      %1861 = vmatprep.subr.bf16.mxu0 0
      %1862 = vmatpush1.bf16.msra.mxu0 0
      %1863 = vmatprep.subr.bf16.mxu0 0
      %1864 = vmatpush1.bf16.msra.mxu0 0
      %1865 = vmatprep.subr.bf16.mxu0 0
      %1866 = vmatpush1.bf16.msra.mxu0 0
      %1867 = vmatprep.subr.bf16.mxu0 0
      %1868 = vmatpush1.bf16.msra.mxu0 0
      %1869 = vmatprep.subr.bf16.mxu0 0
      %1870 = vmatpush1.bf16.msra.mxu0 0
      %1871 = vmatprep.subr.bf16.mxu0 0
      %1872 = vmatpush1.bf16.msra.mxu0 0
      %1873 = vmatprep.subr.bf16.mxu0 0
      %1874 = vmatpush1.bf16.msra.mxu0 0
      %1875 = vmatprep.subr.bf16.mxu0 0
      %1876 = vmatpush1.bf16.msra.mxu0 0
      %1877 = vmatprep.subr.bf16.mxu0 0
      %1878 = vmatpush1.bf16.msra.mxu0 0
      %1879 = vmatprep.subr.bf16.mxu0 0
      %1880 = vmatpush1.bf16.msra.mxu0 0
      %1881 = vmatprep.subr.bf16.mxu0 0
      %1882 = vmatpush1.bf16.msra.mxu0 0
      %1883 = vmatprep.subr.bf16.mxu0 0
      %1884 = vmatpush1.bf16.msra.mxu0 0
      %1885 = vmatprep.subr.bf16.mxu0 0
      %1886 = vmatpush1.bf16.msra.mxu0 0
      %1887 = vmatprep.mubr.bf16.mxu0 0
      %1888 = vmatmul.mubr.bf16.gmra.mrb[0].mxu0 %v1853
      %v1889 = vpop.f32.mrb[0].mxu0
      %v1890 = vadd.f32 0.0, %v1889
      %v1891 = vpop.f32.mrb[0].mxu0
      %v1892 = vadd.f32 0.0, %v1891
      %v1893 = vpop.f32.mrb[0].mxu0
      %v1894 = vadd.f32 0.0, %v1893
      %v1895 = vpop.f32.mrb[0].mxu0
      %v1896 = vadd.f32 0.0, %v1895
      %1897 = vdwg.mxu0
      %v1898 = vadd.f32 %v1822, %v1890
      %v1899 = vadd.f32 %v1823, %v1892
      %v1900 = vadd.f32 %v1824, %v1894
      %v1901 = vadd.f32 %v1825, %v1896
      %v1902 = vld [vmem:[%s8] sm:$0xff]
      %v1903 = vld [vmem:[%s8 + $0x8] sm:$0xff]
      %1905 = vset.pattern.permute.xlu0 0
      %1906 = vperm.xlu0 %1905, %v1902
      %v1907 = vpop.permute.xlu0 %1906
      %1910 = vset.pattern.permute.xlu0 0
      %1911 = vperm.xlu0 %1910, %v1903
      %v1912 = vpop.permute.xlu0 %1911
      %v1914 = vadd.f32 %v1898, %v1907
      %v1915 = vadd.f32 %v1899, %v1907
      %v1916 = vadd.f32 %v1900, %v1912
      %v1917 = vadd.f32 %v1901, %v1912
      %1918 = vst [vmem:[%s332] sm:$0xff] %v1914
      %1919 = vst [vmem:[%s332 + $0x8] sm:$0xff] %v1915
      %1920 = vst [vmem:[%s332 + $0x10] sm:$0xff] %v1916
      %1921 = vst [vmem:[%s332 + $0x18] sm:$0xff] %v1917
      %p1922 = scmp.lt.s32.totalorder %s20, 1
      %s1923 = scalar_select %p1922, %s20, 1
      %s1924 = smul.addr %s1923, 4
      %s1925 = smul.addr %s1924, 8
      %s1926 = scalar_lea.vmem %s9, %s1925
      // Predicated region
      $region57: #{imu_decoder_forward.1} parent=55 // pred_check
        %p1927 = pneg %p232
      $region58: #{imu_decoder_forward.1} parent=55 // pred_check_branch
        %1929 = sbr.rel (%p1927) target = $region60
      $region59: #{imu_decoder_forward.1} parent=55 // pred_region
        _
      $region60: #{imu_decoder_forward.1} parent=55 // pred_fallthru
        _
    $region56: #{imu_decoder_forward.1} parent=5 // pred_fallthru
      _
    %p1930 = scmp.le.s32.totalorder 2, %s15
    // Predicated region
    $region61: #{imu_decoder_forward.1} parent=5 // pred_check
      %p1931 = pneg %p1930
    $region62: #{imu_decoder_forward.1} parent=5 // pred_check_branch
      %1933 = sbr.rel (%p1931) target = $region64
    $region63: #{imu_decoder_forward.1} parent=5 // pred_region
      %s1934 = ssub.s32 %s15, 2
      // Predicated region
      $region65: #{imu_decoder_forward.1} parent=63 // pred_check
        %p1935 = pneg %p238
      $region66: #{imu_decoder_forward.1} parent=63 // pred_check_branch
        %1937 = sbr.rel (%p1935) target = $region68
      $region67: #{imu_decoder_forward.1} parent=63 // pred_region
        %p1938 = scmp.lt.s32.totalorder %s21, 1
        %s1939 = scalar_select %p1938, %s21, 1
        %s1940 = smul.addr %s1939, 4
        %s1941 = smul.addr %s1940, 8
        %s1942 = scalar_lea.vmem %s9, %s1941
      $region68: #{imu_decoder_forward.1} parent=63 // pred_fallthru
        _
    $region64: #{imu_decoder_forward.1} parent=5 // pred_fallthru
      _
  $region6: #{imu_decoder_forward.1} parent=0 // loop_footer
    %s19 = sadd.s32 1, %s15
  $region7: #{imu_decoder_forward.1} parent=0 // loop_footer_branch
    %14 = sbr.rel target = $region3
  $region8: #{imu_decoder_forward.1} parent=0 // loop_exit
    _

</llo_original>
